<compile_context>
chip_gen: v5e
topology: v5e:2x2
jax: 0.10.0
libtpu: 0.0.40
codegen_flags: <defaults>
</compile_context>

<pallas_src>
from functools import partial

import jax
import jax.numpy as jnp
from jax.experimental import pallas as pl
from jax.experimental.pallas import tpu as pltpu


def mixing_kernel(n_agents, embed_dim, hypernet_embed,
                  qs_ref, st_ref,
                  wcat_ref, bcat_ref,     # fused first-layer weights/biases
                  w1b_ref, b1b_ref,       # hyper_w_1 second layer
                  wfb_ref, bfb_ref,       # hyper_w_final second layer
                  wvb_ref, bvb_ref,       # V second layer (as a lane row)
                  out_ref):
    H = hypernet_embed
    E = embed_dim

    qs = qs_ref[...].astype(jnp.float32)          # [Bt, n_agents]   (VPU, f32)
    st = st_ref[...].astype(jnp.bfloat16)         # [Bt, state_dim]  (MXU operand)

    # One fused MXU pass for the four state-fed first layers.
    fused = jnp.dot(st, wcat_ref[...],
                    preferred_element_type=jnp.float32) + bcat_ref[...]
    fused_relu = jnp.maximum(fused, 0.0)
    h1 = fused_relu[:, 0:H]                       # hyper_w_1 hidden      (ReLU)
    hf = fused_relu[:, H:2 * H]                   # hyper_w_final hidden  (ReLU)
    hv = fused_relu[:, 2 * H:2 * H + E]           # V hidden              (ReLU)
    b1 = fused[:, 2 * H + E:2 * H + 2 * E]        # hyper_b_1             (no ReLU)

    # w1 = |hyper_w_1(states)|  -> [Bt, n_agents * embed_dim]
    w1 = jnp.abs(jnp.dot(h1.astype(jnp.bfloat16), w1b_ref[...],
                         preferred_element_type=jnp.float32) + b1b_ref[...])

    # bmm(agent_qs[B,1,n], w1[B,n,e]) + b1  == per-batch weighted sum over agents.
    # w1 flat layout matches torch .view(B, n_agents, embed_dim).
    pre = b1
    for a in range(n_agents):                     # static unroll; n_agents tiny
        pre = pre + qs[:, a:a + 1] * w1[:, a * E:(a + 1) * E]
    # ELU (alpha = 1); exp only sees non-positive arguments.
    hidden = jnp.where(pre > 0, pre, jnp.exp(jnp.minimum(pre, 0.0)) - 1.0)

    # w_final = |hyper_w_final(states)| -> [Bt, embed_dim]
    w_final = jnp.abs(jnp.dot(hf.astype(jnp.bfloat16), wfb_ref[...],
                              preferred_element_type=jnp.float32) + bfb_ref[...])

    # y = bmm(hidden, w_final) + V(states).  V's final Linear(embed, 1) is
    # folded into the same lane reduction (VPU/XLU) instead of an N=1 MXU pass.
    y = jnp.sum(hidden * w_final + hv * wvb_ref[...],
                axis=-1, keepdims=True) + bvb_ref[...]
    out_ref[...] = y.astype(out_ref.dtype)


def mixing_forward(agent_qs, states, params, *,
                   n_agents, embed_dim, hypernet_embed, b_tile=1024):
    """params: flat tuple in the kernel's argument order (see init_params)."""
    batch = agent_qs.shape[0]
    state_dim = states.shape[1]

    # Batch tile: big enough to amortize per-step overhead, small enough for
    # the v5e (16 MiB) / v7x (32 MiB) scoped-VMEM defaults.
    b_tile = min(b_tile, batch)
    if batch % b_tile != 0 or b_tile % 8 != 0:
        b_tile = batch                      # fall back to a single full block

    grid = (batch // b_tile,)
    args = (agent_qs, states) + tuple(params)

    def batch_spec(feat):
        return pl.BlockSpec((b_tile, feat), lambda i: (i, 0))

    def const_spec(arr):
        # Full-array block, constant index -> DMA'd once, VMEM-resident.
        return pl.BlockSpec(arr.shape, lambda i: (0, 0))

    in_specs = ([batch_spec(n_agents), batch_spec(state_dim)]
                + [const_spec(p) for p in params])
    out_specs = pl.BlockSpec((b_tile, 1), lambda i: (i, 0))

    # Advisory cost estimate so XLA schedules this small call sensibly.
    cat = 2 * hypernet_embed + 2 * embed_dim
    flops = 2 * batch * (state_dim * cat
                         + hypernet_embed * (n_agents * embed_dim)
                         + hypernet_embed * embed_dim
                         + (n_agents + 3) * embed_dim)
    weight_bytes = (2 * (state_dim * cat
                         + hypernet_embed * n_agents * embed_dim
                         + hypernet_embed * embed_dim)          # bf16 weights
                    + 4 * (cat + n_agents * embed_dim + 3 * embed_dim + 1))
    bytes_accessed = 4 * batch * (n_agents + state_dim + 1) + weight_bytes

    return pl.pallas_call(
        partial(mixing_kernel, n_agents, embed_dim, hypernet_embed),
        out_shape=jax.ShapeDtypeStruct((batch, 1), jnp.float32),
        grid=grid,
        in_specs=in_specs,
        out_specs=out_specs,
        compiler_params=pltpu.CompilerParams(
            dimension_semantics=("parallel",)),
        cost_estimate=pl.CostEstimate(flops=flops,
                                      transcendentals=batch * embed_dim,
                                      bytes_accessed=bytes_accessed),
    )(*args)


def _xavier(key, fan_in, fan_out, dtype=jnp.float32):
    bound = (6.0 / (fan_in + fan_out)) ** 0.5
    w = jax.random.uniform(key, (fan_in, fan_out), jnp.float32, -bound, bound)
    return w.astype(dtype)


def init_params(key, n_agents, state_dim, embed_dim, hypernet_embed):
    H, E = hypernet_embed, embed_dim
    ks = jax.random.split(key, 8)
    # State-fed first layers, fused column-wise: [h1 | hf | hv | b1].
    w1a = _xavier(ks[0], state_dim, H)          # hyper_w_1[0]
    wfa = _xavier(ks[1], state_dim, H)          # hyper_w_final[0]
    wva = _xavier(ks[2], state_dim, E)          # V[0]
    wb1 = _xavier(ks[3], state_dim, E)          # hyper_b_1
    wcat = jnp.concatenate([w1a, wfa, wva, wb1], axis=1).astype(jnp.bfloat16)
    bcat = jnp.full((1, 2 * H + 2 * E), 0.01, jnp.float32)

    w1b = _xavier(ks[4], H, n_agents * E, jnp.bfloat16)   # hyper_w_1[2]
    b1b = jnp.full((1, n_agents * E), 0.01, jnp.float32)
    wfb = _xavier(ks[5], H, E, jnp.bfloat16)              # hyper_w_final[2]
    bfb = jnp.full((1, E), 0.01, jnp.float32)
    wvb = _xavier(ks[6], E, 1).reshape(1, E)              # V[2] as a lane row (f32, VPU)
    bvb = jnp.full((1, 1), 0.01, jnp.float32)
    return (wcat, bcat, w1b, b1b, wfb, bfb, wvb, bvb)


def mixing_reference(agent_qs, states, params, *,
                     n_agents, embed_dim, hypernet_embed):
    """Pure-JAX f32 reference of the PyTorch MixingNetwork forward."""
    wcat, bcat, w1b, b1b, wfb, bfb, wvb, bvb = params
    H, E = hypernet_embed, embed_dim
    st = states.astype(jnp.float32)
    fused = st @ wcat.astype(jnp.float32) + bcat
    fr = jnp.maximum(fused, 0.0)
    h1, hf, hv = fr[:, :H], fr[:, H:2 * H], fr[:, 2 * H:2 * H + E]
    b1 = fused[:, 2 * H + E:]
    w1 = jnp.abs(h1 @ w1b.astype(jnp.float32) + b1b).reshape(-1, n_agents, E)
    hidden = jax.nn.elu(jnp.einsum('bn,bne->be', agent_qs, w1) + b1)
    w_final = jnp.abs(hf @ wfb.astype(jnp.float32) + bfb)
    v = jnp.sum(hv * wvb, axis=-1, keepdims=True) + bvb
    return jnp.sum(hidden * w_final, axis=-1, keepdims=True) + v


if __name__ == "__main__":
    n_agents = 4
    state_dim = 16
    embed_dim = 32
    hypernet_embed = 64
    batch = 256          # small, but exercises the batch grid (2 tiles of 128)

    key = jax.random.PRNGKey(0)
    k_qs, k_st, k_p = jax.random.split(key, 3)

    agent_qs = jax.random.normal(k_qs, (batch, n_agents), jnp.float32)
    states = jax.random.normal(k_st, (batch, state_dim), jnp.float32)
    params = init_params(k_p, n_agents, state_dim, embed_dim, hypernet_embed)

    q_tot = mixing_forward(agent_qs, states, params,
                           n_agents=n_agents, embed_dim=embed_dim,
                           hypernet_embed=hypernet_embed, b_tile=128)
    jax.block_until_ready(q_tot)

    assert q_tot.shape == (batch, 1)
    assert bool(jnp.all(jnp.isfinite(q_tot)))
    ref = mixing_reference(agent_qs, states, params,
                           n_agents=n_agents, embed_dim=embed_dim,
                           hypernet_embed=hypernet_embed)
    # Loose tolerance: kernel uses bf16 MXU operands with f32 accumulation.
    assert bool(jnp.allclose(q_tot, ref, atol=0.5, rtol=0.1))
    print("KERNEL_OK")
</pallas_src>

<mosaic_0001>
module attributes {stable_mosaic.version = 11 : i64} {
  func.func @mixing_kernel(%arg0: i32, %arg1: memref<128x4xf32, #tpu.memory_space<vmem>>, %arg2: memref<128x16xf32, #tpu.memory_space<vmem>>, %arg3: memref<16x192xbf16, #tpu.memory_space<vmem>>, %arg4: memref<1x192xf32, #tpu.memory_space<vmem>>, %arg5: memref<64x128xbf16, #tpu.memory_space<vmem>>, %arg6: memref<1x128xf32, #tpu.memory_space<vmem>>, %arg7: memref<64x32xbf16, #tpu.memory_space<vmem>>, %arg8: memref<1x32xf32, #tpu.memory_space<vmem>>, %arg9: memref<1x32xf32, #tpu.memory_space<vmem>>, %arg10: memref<1x1xf32, #tpu.memory_space<vmem>>, %arg11: memref<128x1xf32, #tpu.memory_space<vmem>>) attributes {dimension_semantics = [#tpu.dimension_semantics<parallel>], iteration_bounds = array<i64: 2>, scalar_prefetch = 0 : i64, scratch_operands = 0 : i64, tpu.core_type = #tpu.core_type<tc>, window_params = [{transform_indices = @transform_0, window_bounds = array<i64: 128, 4>}, {transform_indices = @transform_1, window_bounds = array<i64: 128, 16>}, {pipeline_mode = #tpu.pipeline_mode<synchronous>, transform_indices = @transform_2, window_bounds = array<i64: 16, 192>}, {pipeline_mode = #tpu.pipeline_mode<synchronous>, transform_indices = @transform_3, window_bounds = array<i64: 1, 192>}, {pipeline_mode = #tpu.pipeline_mode<synchronous>, transform_indices = @transform_4, window_bounds = array<i64: 64, 128>}, {pipeline_mode = #tpu.pipeline_mode<synchronous>, transform_indices = @transform_5, window_bounds = array<i64: 1, 128>}, {pipeline_mode = #tpu.pipeline_mode<synchronous>, transform_indices = @transform_6, window_bounds = array<i64: 64, 32>}, {pipeline_mode = #tpu.pipeline_mode<synchronous>, transform_indices = @transform_7, window_bounds = array<i64: 1, 32>}, {pipeline_mode = #tpu.pipeline_mode<synchronous>, transform_indices = @transform_8, window_bounds = array<i64: 1, 32>}, {pipeline_mode = #tpu.pipeline_mode<synchronous>, transform_indices = @transform_9, window_bounds = array<i64: 1, 1>}, {transform_indices = @transform_10, window_bounds = array<i64: 128, 1>}]} {
    %c0 = arith.constant 0 : index
    %c0_0 = arith.constant 0 : index
    %0 = vector.load %arg1[%c0, %c0_0] : memref<128x4xf32, #tpu.memory_space<vmem>>, vector<128x4xf32>
    %c0_1 = arith.constant 0 : index
    %c0_2 = arith.constant 0 : index
    %1 = vector.load %arg2[%c0_1, %c0_2] : memref<128x16xf32, #tpu.memory_space<vmem>>, vector<128x16xf32>
    %2 = arith.truncf %1 : vector<128x16xf32> to vector<128x16xbf16>
    %c0_3 = arith.constant 0 : index
    %c0_4 = arith.constant 0 : index
    %3 = vector.load %arg3[%c0_3, %c0_4] : memref<16x192xbf16, #tpu.memory_space<vmem>>, vector<16x192xbf16>
    %cst = arith.constant dense<0.000000e+00> : vector<128x192xf32>
    %4 = tpu.matmul %2, %3, %cst {dimension_numbers = #tpu.dot_dimension_numbers<[1], [0], [0], [1], [0, 0, 1, 1], [], []>} : vector<128x16xbf16>, vector<16x192xbf16>, vector<128x192xf32> -> vector<128x192xf32>
    %c0_5 = arith.constant 0 : index
    %c0_6 = arith.constant 0 : index
    %5 = vector.load %arg4[%c0_5, %c0_6] : memref<1x192xf32, #tpu.memory_space<vmem>>, vector<1x192xf32>
    %6 = vector.broadcast %5 : vector<1x192xf32> to vector<128x192xf32>
    %7 = arith.addf %4, %6 : vector<128x192xf32>
    %cst_7 = arith.constant 0.000000e+00 : f32
    %8 = vector.broadcast %cst_7 : f32 to vector<128x192xf32>
    %9 = arith.maximumf %7, %8 : vector<128x192xf32>
    %10 = vector.extract_strided_slice %9 {offsets = [0, 0], sizes = [128, 64], strides = [1, 1]} : vector<128x192xf32> to vector<128x64xf32>
    %11 = vector.extract_strided_slice %9 {offsets = [0, 64], sizes = [128, 64], strides = [1, 1]} : vector<128x192xf32> to vector<128x64xf32>
    %12 = vector.extract_strided_slice %9 {offsets = [0, 128], sizes = [128, 32], strides = [1, 1]} : vector<128x192xf32> to vector<128x32xf32>
    %13 = vector.extract_strided_slice %7 {offsets = [0, 160], sizes = [128, 32], strides = [1, 1]} : vector<128x192xf32> to vector<128x32xf32>
    %14 = arith.truncf %10 : vector<128x64xf32> to vector<128x64xbf16>
    %c0_8 = arith.constant 0 : index
    %c0_9 = arith.constant 0 : index
    %15 = vector.load %arg5[%c0_8, %c0_9] : memref<64x128xbf16, #tpu.memory_space<vmem>>, vector<64x128xbf16>
    %cst_10 = arith.constant dense<0.000000e+00> : vector<128x128xf32>
    %16 = tpu.matmul %14, %15, %cst_10 {dimension_numbers = #tpu.dot_dimension_numbers<[1], [0], [0], [1], [0, 0, 1, 1], [], []>} : vector<128x64xbf16>, vector<64x128xbf16>, vector<128x128xf32> -> vector<128x128xf32>
    %c0_11 = arith.constant 0 : index
    %c0_12 = arith.constant 0 : index
    %17 = vector.load %arg6[%c0_11, %c0_12] : memref<1x128xf32, #tpu.memory_space<vmem>>, vector<1x128xf32>
    %18 = vector.broadcast %17 : vector<1x128xf32> to vector<128x128xf32>
    %19 = arith.addf %16, %18 : vector<128x128xf32>
    %20 = math.absf %19 : vector<128x128xf32>
    %21 = vector.extract_strided_slice %0 {offsets = [0, 0], sizes = [128, 1], strides = [1, 1]} : vector<128x4xf32> to vector<128x1xf32>
    %22 = vector.extract_strided_slice %20 {offsets = [0, 0], sizes = [128, 32], strides = [1, 1]} : vector<128x128xf32> to vector<128x32xf32>
    %23 = vector.broadcast %21 : vector<128x1xf32> to vector<128x32xf32>
    %24 = arith.mulf %23, %22 : vector<128x32xf32>
    %25 = arith.addf %13, %24 : vector<128x32xf32>
    %26 = vector.extract_strided_slice %0 {offsets = [0, 1], sizes = [128, 1], strides = [1, 1]} : vector<128x4xf32> to vector<128x1xf32>
    %27 = vector.extract_strided_slice %20 {offsets = [0, 32], sizes = [128, 32], strides = [1, 1]} : vector<128x128xf32> to vector<128x32xf32>
    %28 = vector.broadcast %26 : vector<128x1xf32> to vector<128x32xf32>
    %29 = arith.mulf %28, %27 : vector<128x32xf32>
    %30 = arith.addf %25, %29 : vector<128x32xf32>
    %31 = vector.extract_strided_slice %0 {offsets = [0, 2], sizes = [128, 1], strides = [1, 1]} : vector<128x4xf32> to vector<128x1xf32>
    %32 = vector.extract_strided_slice %20 {offsets = [0, 64], sizes = [128, 32], strides = [1, 1]} : vector<128x128xf32> to vector<128x32xf32>
    %33 = vector.broadcast %31 : vector<128x1xf32> to vector<128x32xf32>
    %34 = arith.mulf %33, %32 : vector<128x32xf32>
    %35 = arith.addf %30, %34 : vector<128x32xf32>
    %36 = vector.extract_strided_slice %0 {offsets = [0, 3], sizes = [128, 1], strides = [1, 1]} : vector<128x4xf32> to vector<128x1xf32>
    %37 = vector.extract_strided_slice %20 {offsets = [0, 96], sizes = [128, 32], strides = [1, 1]} : vector<128x128xf32> to vector<128x32xf32>
    %38 = vector.broadcast %36 : vector<128x1xf32> to vector<128x32xf32>
    %39 = arith.mulf %38, %37 : vector<128x32xf32>
    %40 = arith.addf %35, %39 : vector<128x32xf32>
    %cst_13 = arith.constant 0.000000e+00 : f32
    %41 = vector.broadcast %cst_13 : f32 to vector<128x32xf32>
    %42 = arith.cmpf ogt, %40, %41 : vector<128x32xf32>
    %cst_14 = arith.constant 0.000000e+00 : f32
    %43 = vector.broadcast %cst_14 : f32 to vector<128x32xf32>
    %44 = arith.minimumf %40, %43 : vector<128x32xf32>
    %45 = math.exp %44 : vector<128x32xf32>
    %cst_15 = arith.constant 1.000000e+00 : f32
    %46 = vector.broadcast %cst_15 : f32 to vector<128x32xf32>
    %47 = arith.subf %45, %46 : vector<128x32xf32>
    %48 = arith.select %42, %40, %47 : vector<128x32xi1>, vector<128x32xf32>
    %49 = arith.truncf %11 : vector<128x64xf32> to vector<128x64xbf16>
    %c0_16 = arith.constant 0 : index
    %c0_17 = arith.constant 0 : index
    %50 = vector.load %arg7[%c0_16, %c0_17] : memref<64x32xbf16, #tpu.memory_space<vmem>>, vector<64x32xbf16>
    %cst_18 = arith.constant dense<0.000000e+00> : vector<128x32xf32>
    %51 = tpu.matmul %49, %50, %cst_18 {dimension_numbers = #tpu.dot_dimension_numbers<[1], [0], [0], [1], [0, 0, 1, 1], [], []>} : vector<128x64xbf16>, vector<64x32xbf16>, vector<128x32xf32> -> vector<128x32xf32>
    %c0_19 = arith.constant 0 : index
    %c0_20 = arith.constant 0 : index
    %52 = vector.load %arg8[%c0_19, %c0_20] : memref<1x32xf32, #tpu.memory_space<vmem>>, vector<1x32xf32>
    %53 = vector.broadcast %52 : vector<1x32xf32> to vector<128x32xf32>
    %54 = arith.addf %51, %53 : vector<128x32xf32>
    %55 = math.absf %54 : vector<128x32xf32>
    %56 = arith.mulf %48, %55 : vector<128x32xf32>
    %c0_21 = arith.constant 0 : index
    %c0_22 = arith.constant 0 : index
    %57 = vector.load %arg9[%c0_21, %c0_22] : memref<1x32xf32, #tpu.memory_space<vmem>>, vector<1x32xf32>
    %58 = vector.broadcast %57 : vector<1x32xf32> to vector<128x32xf32>
    %59 = arith.mulf %12, %58 : vector<128x32xf32>
    %60 = arith.addf %56, %59 : vector<128x32xf32>
    %cst_23 = arith.constant dense<0.000000e+00> : vector<128xf32>
    %61 = vector.multi_reduction <add>, %60, %cst_23 [1] : vector<128x32xf32> to vector<128xf32>
    %62 = vector.shape_cast %61 : vector<128xf32> to vector<128x1xf32>
    %c0_24 = arith.constant 0 : index
    %c0_25 = arith.constant 0 : index
    %63 = vector.load %arg10[%c0_24, %c0_25] : memref<1x1xf32, #tpu.memory_space<vmem>>, vector<1x1xf32>
    %64 = vector.broadcast %63 : vector<1x1xf32> to vector<128x1xf32>
    %65 = arith.addf %62, %64 : vector<128x1xf32>
    %c0_26 = arith.constant 0 : index
    %c0_27 = arith.constant 0 : index
    %66 = vector.load %arg11[%c0_26, %c0_27] : memref<128x1xf32, #tpu.memory_space<vmem>>, vector<128x1xf32>
    tpu.vector_store %arg11[%c0_26, %c0_27], %65 {strides = array<i32>} : memref<128x1xf32, #tpu.memory_space<vmem>>, vector<128x1xf32>,
    return
  }
  func.func @transform_0(%arg0: i32) -> (i32, i32) {
    %c0_i32 = arith.constant 0 : i32
    %c0_i32_0 = arith.constant 0 : i32
    return %arg0, %c0_i32 : i32, i32
  }
  func.func @transform_1(%arg0: i32) -> (i32, i32) {
    %c0_i32 = arith.constant 0 : i32
    %c0_i32_0 = arith.constant 0 : i32
    return %arg0, %c0_i32 : i32, i32
  }
  func.func @transform_2(%arg0: i32) -> (i32, i32) {
    %c0_i32 = arith.constant 0 : i32
    %c0_i32_0 = arith.constant 0 : i32
    %c0_i32_1 = arith.constant 0 : i32
    return %c0_i32, %c0_i32_0 : i32, i32
  }
  func.func @transform_3(%arg0: i32) -> (i32, i32) {
    %c0_i32 = arith.constant 0 : i32
    %c0_i32_0 = arith.constant 0 : i32
    %c0_i32_1 = arith.constant 0 : i32
    return %c0_i32, %c0_i32_0 : i32, i32
  }
  func.func @transform_4(%arg0: i32) -> (i32, i32) {
    %c0_i32 = arith.constant 0 : i32
    %c0_i32_0 = arith.constant 0 : i32
    %c0_i32_1 = arith.constant 0 : i32
    return %c0_i32, %c0_i32_0 : i32, i32
  }
  func.func @transform_5(%arg0: i32) -> (i32, i32) {
    %c0_i32 = arith.constant 0 : i32
    %c0_i32_0 = arith.constant 0 : i32
    %c0_i32_1 = arith.constant 0 : i32
    return %c0_i32, %c0_i32_0 : i32, i32
  }
  func.func @transform_6(%arg0: i32) -> (i32, i32) {
    %c0_i32 = arith.constant 0 : i32
    %c0_i32_0 = arith.constant 0 : i32
    %c0_i32_1 = arith.constant 0 : i32
    return %c0_i32, %c0_i32_0 : i32, i32
  }
  func.func @transform_7(%arg0: i32) -> (i32, i32) {
    %c0_i32 = arith.constant 0 : i32
    %c0_i32_0 = arith.constant 0 : i32
    %c0_i32_1 = arith.constant 0 : i32
    return %c0_i32, %c0_i32_0 : i32, i32
  }
  func.func @transform_8(%arg0: i32) -> (i32, i32) {
    %c0_i32 = arith.constant 0 : i32
    %c0_i32_0 = arith.constant 0 : i32
    %c0_i32_1 = arith.constant 0 : i32
    return %c0_i32, %c0_i32_0 : i32, i32
  }
  func.func @transform_9(%arg0: i32) -> (i32, i32) {
    %c0_i32 = arith.constant 0 : i32
    %c0_i32_0 = arith.constant 0 : i32
    %c0_i32_1 = arith.constant 0 : i32
    return %c0_i32, %c0_i32_0 : i32, i32
  }
  func.func @transform_10(%arg0: i32) -> (i32, i32) {
    %c0_i32 = arith.constant 0 : i32
    %c0_i32_0 = arith.constant 0 : i32
    return %arg0, %c0_i32 : i32, i32
  }
}

</mosaic_0001>

<llo_original>
// kernel: tpu_custom_call.1
$region0: #{tpu_custom_call.1}
  #allocation0 [shape = 'u32[]', space=smem, size = 0x4, offset = 0x4, fixed_abs, tag = 'smem constant byte address 0x4 - core index']
  #allocation1 [shape = 'u32[72,128]{1,0:T(1,128)}', space=vmem, size = 0x9000, scoped, tag = 'internal scratch']
  #allocation2 [shape = 'f32[1,1]{1,0:T(1,128)S(1)}', space=vmem, size = 0x200, scoped, tag = 'scoped memory for tpu_custom_call.1']
  %s0 = inlined_call_operand.vmem [shape: f32[256,4], index: 0, kind: input, shape index: {}]
  %s1 = inlined_call_operand.vmem [shape: f32[256,16], index: 1, kind: input, shape index: {}]
  %s2 = inlined_call_operand.vmem [shape: bf16[16,192], index: 2, kind: input, shape index: {}]
  %s3 = inlined_call_operand.vmem [shape: f32[1,192], index: 3, kind: input, shape index: {}]
  %s4 = inlined_call_operand.vmem [shape: bf16[64,128], index: 4, kind: input, shape index: {}]
  %s5 = inlined_call_operand.vmem [shape: f32[1,128], index: 5, kind: input, shape index: {}]
  %s6 = inlined_call_operand.vmem [shape: bf16[64,32], index: 6, kind: input, shape index: {}]
  %s7 = inlined_call_operand.vmem [shape: f32[1,32], index: 7, kind: input, shape index: {}]
  %s8 = inlined_call_operand.vmem [shape: f32[1,32], index: 8, kind: input, shape index: {}]
  %s9 = inlined_call_operand.<no memory space> [shape: f32[1,1], index: 9, kind: input, shape index: {}]
  %s10 = inlined_call_operand.vmem [shape: f32[256,1], index: 10, kind: output, shape index: {}]
  %s11 = sld [smem:[#allocation0]]
  $region73: #{tpu_custom_call.1} parent=0
    _
  %s13 = ssub.s32 1, %s11
  %s14 = scalar_select 0, %s13, %s11
  %v15 = vstv %s9
  %16 = vst [vmem:[#allocation2] sm:$0x1] %v15
  loop: start=0, step=1, limit=4
  $region2: #{tpu_custom_call.1} parent=0 // loop_pre_header
    _
  $region3: #{tpu_custom_call.1} parent=0 // loop_header
    %s18 = sphi 0, %s22
    %p19 = scmp.ge.s32.totalorder %s18, 4
    %s28 = sphi 0, %s30
    %s31 = sphi 0, %s28
    %s32 = sphi 0, %s31
    %s48 = sphi 0, %s32
    %s54 = sphi 0, %s56
    %s57 = sphi 0, %s54
    %s58 = sphi 0, %s57
    %s74 = sphi 0, %s58
    %s78 = sphi 0, %s78
    %s80 = sphi 0, %s78
    %s81 = sphi 0, %s80
    %s95 = sphi 0, %s81
    %s99 = sphi 0, %s99
    %s101 = sphi 0, %s99
    %s102 = sphi 0, %s101
    %s116 = sphi 0, %s102
    %s120 = sphi 0, %s120
    %s122 = sphi 0, %s120
    %s123 = sphi 0, %s122
    %s137 = sphi 0, %s123
    %s141 = sphi 0, %s141
    %s143 = sphi 0, %s141
    %s144 = sphi 0, %s143
    %s158 = sphi 0, %s144
    %s162 = sphi 0, %s162
    %s164 = sphi 0, %s162
    %s165 = sphi 0, %s164
    %s179 = sphi 0, %s165
    %s183 = sphi 0, %s183
    %s185 = sphi 0, %s183
    %s186 = sphi 0, %s185
    %s200 = sphi 0, %s186
    %s204 = sphi 0, %s204
    %s206 = sphi 0, %s204
    %s207 = sphi 0, %s206
    %s221 = sphi 0, %s207
    %s225 = sphi 0, %s225
    %s227 = sphi 0, %s225
    %s228 = sphi 0, %s227
    %s242 = sphi 0, %s228
    %s248 = sphi 0, %s250
    %s251 = sphi 0, %s248
    %s252 = sphi 0, %s251
    %s268 = sphi 0, %s252
  $region4: #{tpu_custom_call.1} parent=0 // loop_header_branch
    %21 = sbr.rel (%p19) target = $region8
  $region5: #{tpu_custom_call.1} parent=0 // loop_body
    %s23 = ssub.s32 %s18, 1
    %s24 = ssub.s32 %s18, 2
    %s25 = sadd.s32 %s18, 1
    %s26 = ssub.s32 %s18, %s25
    %p27 = scmp.eq.s32.totalorder %s26, 0
    %s29 = sadd.s32 %s28, 1
    %s30 = scalar_select %p27, %s28, %s29
    %p33 = pneg %p27
    %p34 = scmp.eq.s32.totalorder %s18, 1
    %p35 = por %p33, %p34
    %p36 = scmp.ne.s32.totalorder %s28, %s31
    %p37 = scmp.eq.s32.totalorder %s18, 0
    %p38 = por %p36, %p37
    %p39 = scmp.ne.s32.totalorder %s28, %s31
    %p40 = scmp.eq.s32.totalorder %s23, 1
    %p41 = por %p39, %p40
    %p42 = scmp.ne.s32.totalorder %s31, %s32
    %p43 = scmp.eq.s32.totalorder %s23, 0
    %p44 = por %p42, %p43
    %p45 = scmp.ne.s32.totalorder %s31, %s32
    %p46 = scmp.eq.s32.totalorder %s24, 1
    %p47 = por %p45, %p46
    %p49 = scmp.ne.s32.totalorder %s32, %s48
    %p50 = scmp.eq.s32.totalorder %s24, 0
    %p51 = por %p49, %p50
    %s52 = ssub.s32 %s18, %s25
    %p53 = scmp.eq.s32.totalorder %s52, 0
    %s55 = sadd.s32 %s54, 1
    %s56 = scalar_select %p53, %s54, %s55
    %p59 = pneg %p53
    %p60 = scmp.eq.s32.totalorder %s18, 1
    %p61 = por %p59, %p60
    %p62 = scmp.ne.s32.totalorder %s54, %s57
    %p63 = scmp.eq.s32.totalorder %s18, 0
    %p64 = por %p62, %p63
    %p65 = scmp.ne.s32.totalorder %s54, %s57
    %p66 = scmp.eq.s32.totalorder %s23, 1
    %p67 = por %p65, %p66
    %p68 = scmp.ne.s32.totalorder %s57, %s58
    %p69 = scmp.eq.s32.totalorder %s23, 0
    %p70 = por %p68, %p69
    %p71 = scmp.ne.s32.totalorder %s57, %s58
    %p72 = scmp.eq.s32.totalorder %s24, 1
    %p73 = por %p71, %p72
    %p75 = scmp.ne.s32.totalorder %s58, %s74
    %p76 = scmp.eq.s32.totalorder %s24, 0
    %p77 = por %p75, %p76
    %s79 = sadd.s32 %s78, 1
    %p82 = scmp.eq.s32.totalorder %s18, 1
    %p83 = scmp.ne.s32.totalorder %s78, %s80
    %p84 = scmp.eq.s32.totalorder %s18, 0
    %p85 = por %p83, %p84
    %p86 = scmp.ne.s32.totalorder %s78, %s80
    %p87 = scmp.eq.s32.totalorder %s23, 1
    %p88 = por %p86, %p87
    %p89 = scmp.ne.s32.totalorder %s80, %s81
    %p90 = scmp.eq.s32.totalorder %s23, 0
    %p91 = por %p89, %p90
    %p92 = scmp.ne.s32.totalorder %s80, %s81
    %p93 = scmp.eq.s32.totalorder %s24, 1
    %p94 = por %p92, %p93
    %p96 = scmp.ne.s32.totalorder %s81, %s95
    %p97 = scmp.eq.s32.totalorder %s24, 0
    %p98 = por %p96, %p97
    %s100 = sadd.s32 %s99, 1
    %p103 = scmp.eq.s32.totalorder %s18, 1
    %p104 = scmp.ne.s32.totalorder %s99, %s101
    %p105 = scmp.eq.s32.totalorder %s18, 0
    %p106 = por %p104, %p105
    %p107 = scmp.ne.s32.totalorder %s99, %s101
    %p108 = scmp.eq.s32.totalorder %s23, 1
    %p109 = por %p107, %p108
    %p110 = scmp.ne.s32.totalorder %s101, %s102
    %p111 = scmp.eq.s32.totalorder %s23, 0
    %p112 = por %p110, %p111
    %p113 = scmp.ne.s32.totalorder %s101, %s102
    %p114 = scmp.eq.s32.totalorder %s24, 1
    %p115 = por %p113, %p114
    %p117 = scmp.ne.s32.totalorder %s102, %s116
    %p118 = scmp.eq.s32.totalorder %s24, 0
    %p119 = por %p117, %p118
    %s121 = sadd.s32 %s120, 1
    %p124 = scmp.eq.s32.totalorder %s18, 1
    %p125 = scmp.ne.s32.totalorder %s120, %s122
    %p126 = scmp.eq.s32.totalorder %s18, 0
    %p127 = por %p125, %p126
    %p128 = scmp.ne.s32.totalorder %s120, %s122
    %p129 = scmp.eq.s32.totalorder %s23, 1
    %p130 = por %p128, %p129
    %p131 = scmp.ne.s32.totalorder %s122, %s123
    %p132 = scmp.eq.s32.totalorder %s23, 0
    %p133 = por %p131, %p132
    %p134 = scmp.ne.s32.totalorder %s122, %s123
    %p135 = scmp.eq.s32.totalorder %s24, 1
    %p136 = por %p134, %p135
    %p138 = scmp.ne.s32.totalorder %s123, %s137
    %p139 = scmp.eq.s32.totalorder %s24, 0
    %p140 = por %p138, %p139
    %s142 = sadd.s32 %s141, 1
    %p145 = scmp.eq.s32.totalorder %s18, 1
    %p146 = scmp.ne.s32.totalorder %s141, %s143
    %p147 = scmp.eq.s32.totalorder %s18, 0
    %p148 = por %p146, %p147
    %p149 = scmp.ne.s32.totalorder %s141, %s143
    %p150 = scmp.eq.s32.totalorder %s23, 1
    %p151 = por %p149, %p150
    %p152 = scmp.ne.s32.totalorder %s143, %s144
    %p153 = scmp.eq.s32.totalorder %s23, 0
    %p154 = por %p152, %p153
    %p155 = scmp.ne.s32.totalorder %s143, %s144
    %p156 = scmp.eq.s32.totalorder %s24, 1
    %p157 = por %p155, %p156
    %p159 = scmp.ne.s32.totalorder %s144, %s158
    %p160 = scmp.eq.s32.totalorder %s24, 0
    %p161 = por %p159, %p160
    %s163 = sadd.s32 %s162, 1
    %p166 = scmp.eq.s32.totalorder %s18, 1
    %p167 = scmp.ne.s32.totalorder %s162, %s164
    %p168 = scmp.eq.s32.totalorder %s18, 0
    %p169 = por %p167, %p168
    %p170 = scmp.ne.s32.totalorder %s162, %s164
    %p171 = scmp.eq.s32.totalorder %s23, 1
    %p172 = por %p170, %p171
    %p173 = scmp.ne.s32.totalorder %s164, %s165
    %p174 = scmp.eq.s32.totalorder %s23, 0
    %p175 = por %p173, %p174
    %p176 = scmp.ne.s32.totalorder %s164, %s165
    %p177 = scmp.eq.s32.totalorder %s24, 1
    %p178 = por %p176, %p177
    %p180 = scmp.ne.s32.totalorder %s165, %s179
    %p181 = scmp.eq.s32.totalorder %s24, 0
    %p182 = por %p180, %p181
    %s184 = sadd.s32 %s183, 1
    %p187 = scmp.eq.s32.totalorder %s18, 1
    %p188 = scmp.ne.s32.totalorder %s183, %s185
    %p189 = scmp.eq.s32.totalorder %s18, 0
    %p190 = por %p188, %p189
    %p191 = scmp.ne.s32.totalorder %s183, %s185
    %p192 = scmp.eq.s32.totalorder %s23, 1
    %p193 = por %p191, %p192
    %p194 = scmp.ne.s32.totalorder %s185, %s186
    %p195 = scmp.eq.s32.totalorder %s23, 0
    %p196 = por %p194, %p195
    %p197 = scmp.ne.s32.totalorder %s185, %s186
    %p198 = scmp.eq.s32.totalorder %s24, 1
    %p199 = por %p197, %p198
    %p201 = scmp.ne.s32.totalorder %s186, %s200
    %p202 = scmp.eq.s32.totalorder %s24, 0
    %p203 = por %p201, %p202
    %s205 = sadd.s32 %s204, 1
    %p208 = scmp.eq.s32.totalorder %s18, 1
    %p209 = scmp.ne.s32.totalorder %s204, %s206
    %p210 = scmp.eq.s32.totalorder %s18, 0
    %p211 = por %p209, %p210
    %p212 = scmp.ne.s32.totalorder %s204, %s206
    %p213 = scmp.eq.s32.totalorder %s23, 1
    %p214 = por %p212, %p213
    %p215 = scmp.ne.s32.totalorder %s206, %s207
    %p216 = scmp.eq.s32.totalorder %s23, 0
    %p217 = por %p215, %p216
    %p218 = scmp.ne.s32.totalorder %s206, %s207
    %p219 = scmp.eq.s32.totalorder %s24, 1
    %p220 = por %p218, %p219
    %p222 = scmp.ne.s32.totalorder %s207, %s221
    %p223 = scmp.eq.s32.totalorder %s24, 0
    %p224 = por %p222, %p223
    %s226 = sadd.s32 %s225, 1
    %p229 = scmp.eq.s32.totalorder %s18, 1
    %p230 = scmp.ne.s32.totalorder %s225, %s227
    %p231 = scmp.eq.s32.totalorder %s18, 0
    %p232 = por %p230, %p231
    %p233 = scmp.ne.s32.totalorder %s225, %s227
    %p234 = scmp.eq.s32.totalorder %s23, 1
    %p235 = por %p233, %p234
    %p236 = scmp.ne.s32.totalorder %s227, %s228
    %p237 = scmp.eq.s32.totalorder %s23, 0
    %p238 = por %p236, %p237
    %p239 = scmp.ne.s32.totalorder %s227, %s228
    %p240 = scmp.eq.s32.totalorder %s24, 1
    %p241 = por %p239, %p240
    %p243 = scmp.ne.s32.totalorder %s228, %s242
    %p244 = scmp.eq.s32.totalorder %s24, 0
    %p245 = por %p243, %p244
    %s246 = ssub.s32 %s18, %s25
    %p247 = scmp.eq.s32.totalorder %s246, 0
    %s249 = sadd.s32 %s248, 1
    %s250 = scalar_select %p247, %s248, %s249
    %p253 = pneg %p247
    %p254 = scmp.eq.s32.totalorder %s18, 1
    %p255 = por %p253, %p254
    %p256 = scmp.ne.s32.totalorder %s248, %s251
    %p257 = scmp.eq.s32.totalorder %s18, 0
    %p258 = por %p256, %p257
    %p259 = scmp.ne.s32.totalorder %s248, %s251
    %p260 = scmp.eq.s32.totalorder %s23, 1
    %p261 = por %p259, %p260
    %p262 = scmp.ne.s32.totalorder %s251, %s252
    %p263 = scmp.eq.s32.totalorder %s23, 0
    %p264 = por %p262, %p263
    %p265 = scmp.ne.s32.totalorder %s251, %s252
    %p266 = scmp.eq.s32.totalorder %s24, 1
    %p267 = por %p265, %p266
    %p269 = scmp.ne.s32.totalorder %s252, %s268
    %p270 = scmp.eq.s32.totalorder %s24, 0
    %p271 = por %p269, %p270
    %p272 = scmp.le.s32.totalorder 1, %s18
    %p273 = scmp.lt.s32.totalorder %s18, 3
    %p274 = pnand %p272, %p273
    %p275 = pneg %p274
    // Predicated region
    $region9: #{tpu_custom_call.1} parent=5 // pred_check
      _
    $region10: #{tpu_custom_call.1} parent=5 // pred_check_branch
      %277 = sbr.rel (%p274) target = $region12
    $region11: #{tpu_custom_call.1} parent=5 // pred_region
      %s278 = ssub.s32 %s18, 1
      // Predicated region
      $region13: #{tpu_custom_call.1} parent=11 // pred_check
        %p279 = pneg %p91
      $region14: #{tpu_custom_call.1} parent=11 // pred_check_branch
        %281 = sbr.rel (%p279) target = $region16
      $region15: #{tpu_custom_call.1} parent=11 // pred_region
        _
      $region16: #{tpu_custom_call.1} parent=11 // pred_fallthru
        _
      // Predicated region
      $region17: #{tpu_custom_call.1} parent=11 // pred_check
        %p282 = pneg %p112
      $region18: #{tpu_custom_call.1} parent=11 // pred_check_branch
        %284 = sbr.rel (%p282) target = $region20
      $region19: #{tpu_custom_call.1} parent=11 // pred_region
        _
      $region20: #{tpu_custom_call.1} parent=11 // pred_fallthru
        _
      // Predicated region
      $region21: #{tpu_custom_call.1} parent=11 // pred_check
        %p285 = pneg %p133
      $region22: #{tpu_custom_call.1} parent=11 // pred_check_branch
        %287 = sbr.rel (%p285) target = $region24
      $region23: #{tpu_custom_call.1} parent=11 // pred_region
        _
      $region24: #{tpu_custom_call.1} parent=11 // pred_fallthru
        _
      // Predicated region
      $region25: #{tpu_custom_call.1} parent=11 // pred_check
        %p288 = pneg %p154
      $region26: #{tpu_custom_call.1} parent=11 // pred_check_branch
        %290 = sbr.rel (%p288) target = $region28
      $region27: #{tpu_custom_call.1} parent=11 // pred_region
        _
      $region28: #{tpu_custom_call.1} parent=11 // pred_fallthru
        _
      // Predicated region
      $region29: #{tpu_custom_call.1} parent=11 // pred_check
        %p291 = pneg %p175
      $region30: #{tpu_custom_call.1} parent=11 // pred_check_branch
        %293 = sbr.rel (%p291) target = $region32
      $region31: #{tpu_custom_call.1} parent=11 // pred_region
        _
      $region32: #{tpu_custom_call.1} parent=11 // pred_fallthru
        _
      // Predicated region
      $region33: #{tpu_custom_call.1} parent=11 // pred_check
        %p294 = pneg %p196
      $region34: #{tpu_custom_call.1} parent=11 // pred_check_branch
        %296 = sbr.rel (%p294) target = $region36
      $region35: #{tpu_custom_call.1} parent=11 // pred_region
        _
      $region36: #{tpu_custom_call.1} parent=11 // pred_fallthru
        _
      // Predicated region
      $region37: #{tpu_custom_call.1} parent=11 // pred_check
        %p297 = pneg %p217
      $region38: #{tpu_custom_call.1} parent=11 // pred_check_branch
        %299 = sbr.rel (%p297) target = $region40
      $region39: #{tpu_custom_call.1} parent=11 // pred_region
        _
      $region40: #{tpu_custom_call.1} parent=11 // pred_fallthru
        _
      // Predicated region
      $region41: #{tpu_custom_call.1} parent=11 // pred_check
        %p300 = pneg %p238
      $region42: #{tpu_custom_call.1} parent=11 // pred_check_branch
        %302 = sbr.rel (%p300) target = $region44
      $region43: #{tpu_custom_call.1} parent=11 // pred_region
        _
      $region44: #{tpu_custom_call.1} parent=11 // pred_fallthru
        _
    $region12: #{tpu_custom_call.1} parent=5 // pred_fallthru
      _
    %p303 = scmp.lt.s32.totalorder %s18, 2
    // Predicated region
    $region45: #{tpu_custom_call.1} parent=5 // pred_check
      %p304 = pneg %p303
    $region46: #{tpu_custom_call.1} parent=5 // pred_check_branch
      %306 = sbr.rel (%p304) target = $region48
    $region47: #{tpu_custom_call.1} parent=5 // pred_region
      // Predicated region
      $region49: #{tpu_custom_call.1} parent=47 // pred_check
        %p307 = pneg %p38
      $region50: #{tpu_custom_call.1} parent=47 // pred_check_branch
        %309 = sbr.rel (%p307) target = $region52
      $region51: #{tpu_custom_call.1} parent=47 // pred_region
        %s310 = smul.u32 16, %s18
        %p311 = scmp.lt.s32.totalorder %s310, 31
        %s312 = scalar_select %p311, %s310, 31
        %s313 = smul.addr %s312, 8
        %s314 = scalar_lea.vmem %s0, %s313
        %s315 = smul.u32 16, %s18
      $region52: #{tpu_custom_call.1} parent=47 // pred_fallthru
        _
      // Predicated region
      $region53: #{tpu_custom_call.1} parent=47 // pred_check
        %p316 = pneg %p64
      $region54: #{tpu_custom_call.1} parent=47 // pred_check_branch
        %318 = sbr.rel (%p316) target = $region56
      $region55: #{tpu_custom_call.1} parent=47 // pred_region
        %s319 = smul.u32 16, %s18
        %p320 = scmp.lt.s32.totalorder %s319, 31
        %s321 = scalar_select %p320, %s319, 31
        %s322 = smul.addr %s321, 8
        %s323 = scalar_lea.vmem %s1, %s322
        %s324 = smul.u32 16, %s18
      $region56: #{tpu_custom_call.1} parent=47 // pred_fallthru
        _
    $region48: #{tpu_custom_call.1} parent=5 // pred_fallthru
      _
    %p325 = scmp.le.s32.totalorder 1, %s18
    %p326 = scmp.lt.s32.totalorder %s18, 3
    %p327 = pnand %p325, %p326
    %p328 = pneg %p327
    // Predicated region
    $region57: #{tpu_custom_call.1} parent=5 // pred_check
      _
    $region58: #{tpu_custom_call.1} parent=5 // pred_check_branch
      %330 = sbr.rel (%p327) target = $region60
    $region59: #{tpu_custom_call.1} parent=5 // pred_region
      %s331 = ssub.s32 %s18, 1
      %s332 = smul.u32 16, %s23
      %p333 = scmp.lt.s32.totalorder %s332, 31
      %s334 = scalar_select %p333, %s332, 31
      %s335 = smul.addr %s334, 8
      %s336 = scalar_lea.vmem %s0, %s335
      %p337 = pneg %p44
      %p338 = pneg %p41
      %s339 = smul.u32 16, %s23
      %p340 = scmp.lt.s32.totalorder %s339, 31
      %s341 = scalar_select %p340, %s339, 31
      %s342 = smul.addr %s341, 8
      %s343 = scalar_lea.vmem %s1, %s342
      %p344 = pneg %p70
      %p345 = pneg %p67
      %p346 = pneg %p91
      %p347 = pneg %p88
      %p348 = pneg %p112
      %p349 = pneg %p109
      %p350 = pneg %p133
      %p351 = pneg %p130
      %p352 = pneg %p154
      %p353 = pneg %p151
      %p354 = pneg %p175
      %p355 = pneg %p172
      %p356 = pneg %p196
      %p357 = pneg %p193
      %p358 = pneg %p217
      %p359 = pneg %p214
      %p360 = pneg %p238
      %p361 = pneg %p235
      %p362 = pneg %p264
      %p363 = pneg %p261
      %s364 = smul.u32 16, %s23
      %p365 = scmp.lt.s32.totalorder %s364, 31
      %s366 = scalar_select %p365, %s364, 31
      %s367 = smul.addr %s366, 8
      %s368 = scalar_lea.vmem %s10, %s367
      %s369 = smul.u32 16, %s23
      %p370 = scmp.lt.s32.totalorder %s369, 31
      %s371 = scalar_select %p370, %s369, 31
      %s372 = smul.addr %s371, 8
      %s373 = scalar_lea.vmem %s0, %s372
      %s374 = smul.u32 16, %s23
      %s375 = smul.u32 16, %s23
      %p376 = scmp.lt.s32.totalorder %s375, 31
      %s377 = scalar_select %p376, %s375, 31
      %s378 = smul.addr %s377, 8
      %s379 = scalar_lea.vmem %s1, %s378
      %s380 = smul.u32 16, %s23
      %s381 = smul.u32 16, %s23
      %p382 = scmp.lt.s32.totalorder %s381, 31
      %s383 = scalar_select %p382, %s381, 31
      %s384 = smul.addr %s383, 8
      %s385 = scalar_lea.vmem %s10, %s384
      %s386 = smul.u32 16, %s23
      %v388 = vld [vmem:[%s373] sm:$0xff]
      %v389 = vld [vmem:[%s373 + $0x8] sm:$0xff]
      %v390 = vld [vmem:[%s373 + $0x10] sm:$0xff]
      %v391 = vld [vmem:[%s373 + $0x18] sm:$0xff]
      %v392 = vld [vmem:[%s373 + $0x20] sm:$0xff]
      %v393 = vld [vmem:[%s373 + $0x28] sm:$0xff]
      %v394 = vld [vmem:[%s373 + $0x30] sm:$0xff]
      %v395 = vld [vmem:[%s373 + $0x38] sm:$0xff]
      %v396 = vld [vmem:[%s373 + $0x40] sm:$0xff]
      %v397 = vld [vmem:[%s373 + $0x48] sm:$0xff]
      %v398 = vld [vmem:[%s373 + $0x50] sm:$0xff]
      %v399 = vld [vmem:[%s373 + $0x58] sm:$0xff]
      %v400 = vld [vmem:[%s373 + $0x60] sm:$0xff]
      %v401 = vld [vmem:[%s373 + $0x68] sm:$0xff]
      %v402 = vld [vmem:[%s373 + $0x70] sm:$0xff]
      %v403 = vld [vmem:[%s373 + $0x78] sm:$0xff]
      %v404 = vld [vmem:[%s379] sm:$0xff]
      %v405 = vld [vmem:[%s379 + $0x8] sm:$0xff]
      %v406 = vld [vmem:[%s379 + $0x10] sm:$0xff]
      %v407 = vld [vmem:[%s379 + $0x18] sm:$0xff]
      %v408 = vld [vmem:[%s379 + $0x20] sm:$0xff]
      %v409 = vld [vmem:[%s379 + $0x28] sm:$0xff]
      %v410 = vld [vmem:[%s379 + $0x30] sm:$0xff]
      %v411 = vld [vmem:[%s379 + $0x38] sm:$0xff]
      %v412 = vld [vmem:[%s379 + $0x40] sm:$0xff]
      %v413 = vld [vmem:[%s379 + $0x48] sm:$0xff]
      %v414 = vld [vmem:[%s379 + $0x50] sm:$0xff]
      %v415 = vld [vmem:[%s379 + $0x58] sm:$0xff]
      %v416 = vld [vmem:[%s379 + $0x60] sm:$0xff]
      %v417 = vld [vmem:[%s379 + $0x68] sm:$0xff]
      %v418 = vld [vmem:[%s379 + $0x70] sm:$0xff]
      %v419 = vld [vmem:[%s379 + $0x78] sm:$0xff]
      %v420 = vpack.c.bf16 %v405, %v404
      %v421 = vpack.c.bf16 %v407, %v406
      %v422 = vpack.c.bf16 %v409, %v408
      %v423 = vpack.c.bf16 %v411, %v410
      %v424 = vpack.c.bf16 %v413, %v412
      %v425 = vpack.c.bf16 %v415, %v414
      %v426 = vpack.c.bf16 %v417, %v416
      %v427 = vpack.c.bf16 %v419, %v418
      %v428 = vld [vmem:[%s2] sm:$0xff]
      %v429 = vld [vmem:[%s2 + $0x8] sm:$0xff]
      %v430 = vld [vmem:[%s3] sm:$0x3]
      %v432 = vperm.slane %v430, 0
      %v433 = vperm.slane %v430, 1
      %v438 = vunpack.c.l.b16 %v428
      %v439 = vunpack.c.h.b16 %v428
      %v440 = vunpack.c.l.b16 %v429
      %v441 = vunpack.c.h.b16 %v429
      %v442 = vpack.c.b16 %v440, %v438
      %v443 = vpack.c.b16 %v441, %v439
      %vm446 = vcmask 130048
      %v448 = vsel %vm446, %v420, 0
      %v451 = vsel %vm446, %v421, 0
      %v454 = vsel %vm446, %v422, 0
      %v457 = vsel %vm446, %v423, 0
      %v460 = vsel %vm446, %v424, 0
      %v463 = vsel %vm446, %v425, 0
      %v466 = vsel %vm446, %v426, 0
      %v469 = vsel %vm446, %v427, 0
      %471 = vmatpush.bf16.msra.mxu0 0
      %472 = vmatpush.bf16.msra.mxu0 0
      %473 = vmatpush.bf16.msra.mxu0 0
      %474 = vmatpush.bf16.msra.mxu0 0
      %475 = vmatpush.bf16.msra.mxu0 0
      %476 = vmatpush.bf16.msra.mxu0 0
      %477 = vmatpush.bf16.msra.mxu0 0
      %478 = vmatpush.bf16.msra.mxu0 %v442
      %479 = vmatmul.bf16.gmra.mxu0 %v448
      %v480 = vpop.f32.mrf.mxu0
      %v481 = vadd.f32 %v432, %v480
      %v482 = vpop.f32.mrf.mxu0
      %v483 = vadd.f32 %v432, %v482
      %484 = vmatmul.bf16.gmra.mxu0 %v451
      %v485 = vpop.f32.mrf.mxu0
      %v486 = vadd.f32 %v432, %v485
      %v487 = vpop.f32.mrf.mxu0
      %v488 = vadd.f32 %v432, %v487
      %489 = vmatmul.bf16.gmra.mxu0 %v454
      %v490 = vpop.f32.mrf.mxu0
      %v491 = vadd.f32 %v432, %v490
      %v492 = vpop.f32.mrf.mxu0
      %v493 = vadd.f32 %v432, %v492
      %494 = vmatmul.bf16.gmra.mxu0 %v457
      %v495 = vpop.f32.mrf.mxu0
      %v496 = vadd.f32 %v432, %v495
      %v497 = vpop.f32.mrf.mxu0
      %v498 = vadd.f32 %v432, %v497
      %499 = vmatmul.bf16.gmra.mxu0 %v460
      %v500 = vpop.f32.mrf.mxu0
      %v501 = vadd.f32 %v432, %v500
      %v502 = vpop.f32.mrf.mxu0
      %v503 = vadd.f32 %v432, %v502
      %504 = vmatmul.bf16.gmra.mxu0 %v463
      %v505 = vpop.f32.mrf.mxu0
      %v506 = vadd.f32 %v432, %v505
      %v507 = vpop.f32.mrf.mxu0
      %v508 = vadd.f32 %v432, %v507
      %509 = vmatmul.bf16.gmra.mxu0 %v466
      %v510 = vpop.f32.mrf.mxu0
      %v511 = vadd.f32 %v432, %v510
      %v512 = vpop.f32.mrf.mxu0
      %v513 = vadd.f32 %v432, %v512
      %514 = vmatmul.bf16.gmra.mxu0 %v469
      %v515 = vpop.f32.mrf.mxu0
      %v516 = vadd.f32 %v432, %v515
      %v517 = vpop.f32.mrf.mxu0
      %v518 = vadd.f32 %v432, %v517
      %519 = vdwg.mxu0
      %520 = vmatpush.bf16.msra.mxu0 0
      %521 = vmatpush.bf16.msra.mxu0 0
      %522 = vmatpush.bf16.msra.mxu0 0
      %523 = vmatpush.bf16.msra.mxu0 0
      %524 = vmatpush.bf16.msra.mxu0 0
      %525 = vmatpush.bf16.msra.mxu0 0
      %526 = vmatpush.bf16.msra.mxu0 0
      %527 = vmatpush.bf16.msra.mxu0 %v443
      %528 = vmatmul.bf16.gmra.mxu0 %v448
      %v529 = vpop.f32.mrf.mxu0
      %v530 = vadd.f32 %v433, %v529
      %v531 = vpop.f32.mrf.mxu0
      %v532 = vadd.f32 %v433, %v531
      %533 = vmatmul.bf16.gmra.mxu0 %v451
      %v534 = vpop.f32.mrf.mxu0
      %v535 = vadd.f32 %v433, %v534
      %v536 = vpop.f32.mrf.mxu0
      %v537 = vadd.f32 %v433, %v536
      %538 = vmatmul.bf16.gmra.mxu0 %v454
      %v539 = vpop.f32.mrf.mxu0
      %v540 = vadd.f32 %v433, %v539
      %v541 = vpop.f32.mrf.mxu0
      %v542 = vadd.f32 %v433, %v541
      %543 = vmatmul.bf16.gmra.mxu0 %v457
      %v544 = vpop.f32.mrf.mxu0
      %v545 = vadd.f32 %v433, %v544
      %v546 = vpop.f32.mrf.mxu0
      %v547 = vadd.f32 %v433, %v546
      %548 = vmatmul.bf16.gmra.mxu0 %v460
      %v549 = vpop.f32.mrf.mxu0
      %v550 = vadd.f32 %v433, %v549
      %v551 = vpop.f32.mrf.mxu0
      %v552 = vadd.f32 %v433, %v551
      %553 = vmatmul.bf16.gmra.mxu0 %v463
      %v554 = vpop.f32.mrf.mxu0
      %v555 = vadd.f32 %v433, %v554
      %v556 = vpop.f32.mrf.mxu0
      %v557 = vadd.f32 %v433, %v556
      %558 = vmatmul.bf16.gmra.mxu0 %v466
      %v559 = vpop.f32.mrf.mxu0
      %v560 = vadd.f32 %v433, %v559
      %v561 = vpop.f32.mrf.mxu0
      %v562 = vadd.f32 %v433, %v561
      %563 = vmatmul.bf16.gmra.mxu0 %v469
      %v564 = vpop.f32.mrf.mxu0
      %v565 = vadd.f32 %v433, %v564
      %v566 = vpop.f32.mrf.mxu0
      %v567 = vadd.f32 %v433, %v566
      %568 = vdwg.mxu0
      %v569 = vmax.f32 %v481, 0.0
      %v570 = vmax.f32 %v530, 0.0
      %v571 = vmax.f32 %v483, 0.0
      %v572 = vmax.f32 %v532, 0.0
      %v573 = vmax.f32 %v486, 0.0
      %v574 = vmax.f32 %v535, 0.0
      %v575 = vmax.f32 %v488, 0.0
      %v576 = vmax.f32 %v537, 0.0
      %v577 = vmax.f32 %v491, 0.0
      %v578 = vmax.f32 %v540, 0.0
      %v579 = vmax.f32 %v493, 0.0
      %v580 = vmax.f32 %v542, 0.0
      %v581 = vmax.f32 %v496, 0.0
      %v582 = vmax.f32 %v545, 0.0
      %v583 = vmax.f32 %v498, 0.0
      %v584 = vmax.f32 %v547, 0.0
      %v585 = vmax.f32 %v501, 0.0
      %v586 = vmax.f32 %v550, 0.0
      %v587 = vmax.f32 %v503, 0.0
      %v588 = vmax.f32 %v552, 0.0
      %v589 = vmax.f32 %v506, 0.0
      %v590 = vmax.f32 %v555, 0.0
      %v591 = vmax.f32 %v508, 0.0
      %v592 = vmax.f32 %v557, 0.0
      %v593 = vmax.f32 %v511, 0.0
      %v594 = vmax.f32 %v560, 0.0
      %v595 = vmax.f32 %v513, 0.0
      %v596 = vmax.f32 %v562, 0.0
      %v597 = vmax.f32 %v516, 0.0
      %v598 = vmax.f32 %v565, 0.0
      %v599 = vmax.f32 %v518, 0.0
      %v600 = vmax.f32 %v567, 0.0
      %v601 = vpack.c.bf16 %v571, %v569
      %v602 = vpack.c.bf16 %v575, %v573
      %v603 = vpack.c.bf16 %v579, %v577
      %v604 = vpack.c.bf16 %v583, %v581
      %v605 = vpack.c.bf16 %v587, %v585
      %v606 = vpack.c.bf16 %v591, %v589
      %v607 = vpack.c.bf16 %v595, %v593
      %v608 = vpack.c.bf16 %v599, %v597
      %v609 = vld [vmem:[%s4] sm:$0xf]
      %v610 = vld [vmem:[%s4 + $0x4] sm:$0xf]
      %v611 = vld [vmem:[%s4 + $0x8] sm:$0xf]
      %v612 = vld [vmem:[%s4 + $0xc] sm:$0xf]
      %v613 = vld [vmem:[%s4 + $0x10] sm:$0xf]
      %v614 = vld [vmem:[%s4 + $0x14] sm:$0xf]
      %v615 = vld [vmem:[%s4 + $0x18] sm:$0xf]
      %v616 = vld [vmem:[%s4 + $0x1c] sm:$0xf]
      %v617 = vld [vmem:[%s5] sm:$0x1]
      %v619 = vperm.slane %v617, 0
      %v629 = vunpack.c.l.b16 %v609
      %v630 = vunpack.c.l.b16 %v610
      %v631 = vunpack.c.l.b16 %v611
      %v632 = vunpack.c.l.b16 %v612
      %v633 = vunpack.c.l.b16 %v613
      %v634 = vunpack.c.l.b16 %v614
      %v635 = vunpack.c.l.b16 %v615
      %v636 = vunpack.c.l.b16 %v616
      %v637 = vpack.c.b16 %v630, %v629
      %v638 = vpack.c.b16 %v632, %v631
      %v639 = vpack.c.b16 %v634, %v633
      %v640 = vpack.c.b16 %v636, %v635
      %vm645 = vcmask 523264
      %v647 = vsel %vm645, %v601, 0
      %v650 = vsel %vm645, %v602, 0
      %v653 = vsel %vm645, %v603, 0
      %v656 = vsel %vm645, %v604, 0
      %v659 = vsel %vm645, %v605, 0
      %v662 = vsel %vm645, %v606, 0
      %v665 = vsel %vm645, %v607, 0
      %v668 = vsel %vm645, %v608, 0
      %670 = vmatpush.bf16.msra.mxu0 0
      %671 = vmatpush.bf16.msra.mxu0 0
      %672 = vmatpush.bf16.msra.mxu0 0
      %673 = vmatpush.bf16.msra.mxu0 0
      %674 = vmatpush.bf16.msra.mxu0 %v640
      %675 = vmatpush.bf16.msra.mxu0 %v639
      %676 = vmatpush.bf16.msra.mxu0 %v638
      %677 = vmatpush.bf16.msra.mxu0 %v637
      %678 = vmatmul.bf16.gmra.mxu0 %v647
      %v679 = vpop.f32.mrf.mxu0
      %v680 = vadd.f32 %v619, %v679
      %v681 = vpop.f32.mrf.mxu0
      %v682 = vadd.f32 %v619, %v681
      %683 = vmatmul.bf16.gmra.mxu0 %v650
      %v684 = vpop.f32.mrf.mxu0
      %v685 = vadd.f32 %v619, %v684
      %v686 = vpop.f32.mrf.mxu0
      %v687 = vadd.f32 %v619, %v686
      %688 = vmatmul.bf16.gmra.mxu0 %v653
      %v689 = vpop.f32.mrf.mxu0
      %v690 = vadd.f32 %v619, %v689
      %v691 = vpop.f32.mrf.mxu0
      %v692 = vadd.f32 %v619, %v691
      %693 = vmatmul.bf16.gmra.mxu0 %v656
      %v694 = vpop.f32.mrf.mxu0
      %v695 = vadd.f32 %v619, %v694
      %v696 = vpop.f32.mrf.mxu0
      %v697 = vadd.f32 %v619, %v696
      %698 = vmatmul.bf16.gmra.mxu0 %v659
      %v699 = vpop.f32.mrf.mxu0
      %v700 = vadd.f32 %v619, %v699
      %v701 = vpop.f32.mrf.mxu0
      %v702 = vadd.f32 %v619, %v701
      %703 = vmatmul.bf16.gmra.mxu0 %v662
      %v704 = vpop.f32.mrf.mxu0
      %v705 = vadd.f32 %v619, %v704
      %v706 = vpop.f32.mrf.mxu0
      %v707 = vadd.f32 %v619, %v706
      %708 = vmatmul.bf16.gmra.mxu0 %v665
      %v709 = vpop.f32.mrf.mxu0
      %v710 = vadd.f32 %v619, %v709
      %v711 = vpop.f32.mrf.mxu0
      %v712 = vadd.f32 %v619, %v711
      %713 = vmatmul.bf16.gmra.mxu0 %v668
      %v714 = vpop.f32.mrf.mxu0
      %v715 = vadd.f32 %v619, %v714
      %v716 = vpop.f32.mrf.mxu0
      %v717 = vadd.f32 %v619, %v716
      %718 = vdwg.mxu0
      %v719 = vand.u32 2147483647, %v680
      %v720 = vand.u32 2147483647, %v682
      %v721 = vand.u32 2147483647, %v685
      %v722 = vand.u32 2147483647, %v687
      %v723 = vand.u32 2147483647, %v690
      %v724 = vand.u32 2147483647, %v692
      %v725 = vand.u32 2147483647, %v695
      %v726 = vand.u32 2147483647, %v697
      %v727 = vand.u32 2147483647, %v700
      %v728 = vand.u32 2147483647, %v702
      %v729 = vand.u32 2147483647, %v705
      %v730 = vand.u32 2147483647, %v707
      %v731 = vand.u32 2147483647, %v710
      %v732 = vand.u32 2147483647, %v712
      %v733 = vand.u32 2147483647, %v715
      %v734 = vand.u32 2147483647, %v717
      %736 = vset.pattern.permute.xlu0 0
      %737 = vperm.xlu0 %736, %v388
      %v738 = vpop.permute.xlu0 %737
      %741 = vset.pattern.permute.xlu0 0
      %742 = vperm.xlu0 %741, %v389
      %v743 = vpop.permute.xlu0 %742
      %746 = vset.pattern.permute.xlu0 0
      %747 = vperm.xlu0 %746, %v390
      %v748 = vpop.permute.xlu0 %747
      %751 = vset.pattern.permute.xlu0 0
      %752 = vperm.xlu0 %751, %v391
      %v753 = vpop.permute.xlu0 %752
      %756 = vset.pattern.permute.xlu0 0
      %757 = vperm.xlu0 %756, %v392
      %v758 = vpop.permute.xlu0 %757
      %761 = vset.pattern.permute.xlu0 0
      %762 = vperm.xlu0 %761, %v393
      %v763 = vpop.permute.xlu0 %762
      %766 = vset.pattern.permute.xlu0 0
      %767 = vperm.xlu0 %766, %v394
      %v768 = vpop.permute.xlu0 %767
      %771 = vset.pattern.permute.xlu0 0
      %772 = vperm.xlu0 %771, %v395
      %v773 = vpop.permute.xlu0 %772
      %776 = vset.pattern.permute.xlu0 0
      %777 = vperm.xlu0 %776, %v396
      %v778 = vpop.permute.xlu0 %777
      %781 = vset.pattern.permute.xlu0 0
      %782 = vperm.xlu0 %781, %v397
      %v783 = vpop.permute.xlu0 %782
      %786 = vset.pattern.permute.xlu0 0
      %787 = vperm.xlu0 %786, %v398
      %v788 = vpop.permute.xlu0 %787
      %791 = vset.pattern.permute.xlu0 0
      %792 = vperm.xlu0 %791, %v399
      %v793 = vpop.permute.xlu0 %792
      %796 = vset.pattern.permute.xlu0 0
      %797 = vperm.xlu0 %796, %v400
      %v798 = vpop.permute.xlu0 %797
      %801 = vset.pattern.permute.xlu0 0
      %802 = vperm.xlu0 %801, %v401
      %v803 = vpop.permute.xlu0 %802
      %806 = vset.pattern.permute.xlu0 0
      %807 = vperm.xlu0 %806, %v402
      %v808 = vpop.permute.xlu0 %807
      %811 = vset.pattern.permute.xlu0 0
      %812 = vperm.xlu0 %811, %v403
      %v813 = vpop.permute.xlu0 %812
      %v815 = vmul.f32 %v738, %v719
      %v816 = vmul.f32 %v743, %v720
      %v817 = vmul.f32 %v748, %v721
      %v818 = vmul.f32 %v753, %v722
      %v819 = vmul.f32 %v758, %v723
      %v820 = vmul.f32 %v763, %v724
      %v821 = vmul.f32 %v768, %v725
      %v822 = vmul.f32 %v773, %v726
      %v823 = vmul.f32 %v778, %v727
      %v824 = vmul.f32 %v783, %v728
      %v825 = vmul.f32 %v788, %v729
      %v826 = vmul.f32 %v793, %v730
      %v827 = vmul.f32 %v798, %v731
      %v828 = vmul.f32 %v803, %v732
      %v829 = vmul.f32 %v808, %v733
      %v830 = vmul.f32 %v813, %v734
      %847 = vrot.lane.b32.xlu0 %v815, 32
      %v848 = vpop.permute.xlu0 %847
      %849 = vrot.lane.b32.xlu0 %v816, 32
      %v850 = vpop.permute.xlu0 %849
      %851 = vrot.lane.b32.xlu0 %v817, 32
      %v852 = vpop.permute.xlu0 %851
      %853 = vrot.lane.b32.xlu0 %v818, 32
      %v854 = vpop.permute.xlu0 %853
      %855 = vrot.lane.b32.xlu0 %v819, 32
      %v856 = vpop.permute.xlu0 %855
      %857 = vrot.lane.b32.xlu0 %v820, 32
      %v858 = vpop.permute.xlu0 %857
      %859 = vrot.lane.b32.xlu0 %v821, 32
      %v860 = vpop.permute.xlu0 %859
      %861 = vrot.lane.b32.xlu0 %v822, 32
      %v862 = vpop.permute.xlu0 %861
      %863 = vrot.lane.b32.xlu0 %v823, 32
      %v864 = vpop.permute.xlu0 %863
      %865 = vrot.lane.b32.xlu0 %v824, 32
      %v866 = vpop.permute.xlu0 %865
      %867 = vrot.lane.b32.xlu0 %v825, 32
      %v868 = vpop.permute.xlu0 %867
      %869 = vrot.lane.b32.xlu0 %v826, 32
      %v870 = vpop.permute.xlu0 %869
      %871 = vrot.lane.b32.xlu0 %v827, 32
      %v872 = vpop.permute.xlu0 %871
      %873 = vrot.lane.b32.xlu0 %v828, 32
      %v874 = vpop.permute.xlu0 %873
      %875 = vrot.lane.b32.xlu0 %v829, 32
      %v876 = vpop.permute.xlu0 %875
      %877 = vrot.lane.b32.xlu0 %v830, 32
      %v878 = vpop.permute.xlu0 %877
      %v895 = vadd.f32 %v530, %v848
      %v896 = vadd.f32 %v532, %v850
      %v897 = vadd.f32 %v535, %v852
      %v898 = vadd.f32 %v537, %v854
      %v899 = vadd.f32 %v540, %v856
      %v900 = vadd.f32 %v542, %v858
      %v901 = vadd.f32 %v545, %v860
      %v902 = vadd.f32 %v547, %v862
      %v903 = vadd.f32 %v550, %v864
      %v904 = vadd.f32 %v552, %v866
      %v905 = vadd.f32 %v555, %v868
      %v906 = vadd.f32 %v557, %v870
      %v907 = vadd.f32 %v560, %v872
      %v908 = vadd.f32 %v562, %v874
      %v909 = vadd.f32 %v565, %v876
      %v910 = vadd.f32 %v567, %v878
      %911 = vset.pattern.permute.xlu0 1
      %912 = vperm.xlu0 %911, %v388
      %v913 = vpop.permute.xlu0 %912
      %915 = vset.pattern.permute.xlu0 1
      %916 = vperm.xlu0 %915, %v389
      %v917 = vpop.permute.xlu0 %916
      %919 = vset.pattern.permute.xlu0 1
      %920 = vperm.xlu0 %919, %v390
      %v921 = vpop.permute.xlu0 %920
      %923 = vset.pattern.permute.xlu0 1
      %924 = vperm.xlu0 %923, %v391
      %v925 = vpop.permute.xlu0 %924
      %927 = vset.pattern.permute.xlu0 1
      %928 = vperm.xlu0 %927, %v392
      %v929 = vpop.permute.xlu0 %928
      %931 = vset.pattern.permute.xlu0 1
      %932 = vperm.xlu0 %931, %v393
      %v933 = vpop.permute.xlu0 %932
      %935 = vset.pattern.permute.xlu0 1
      %936 = vperm.xlu0 %935, %v394
      %v937 = vpop.permute.xlu0 %936
      %939 = vset.pattern.permute.xlu0 1
      %940 = vperm.xlu0 %939, %v395
      %v941 = vpop.permute.xlu0 %940
      %943 = vset.pattern.permute.xlu0 1
      %944 = vperm.xlu0 %943, %v396
      %v945 = vpop.permute.xlu0 %944
      %947 = vset.pattern.permute.xlu0 1
      %948 = vperm.xlu0 %947, %v397
      %v949 = vpop.permute.xlu0 %948
      %951 = vset.pattern.permute.xlu0 1
      %952 = vperm.xlu0 %951, %v398
      %v953 = vpop.permute.xlu0 %952
      %955 = vset.pattern.permute.xlu0 1
      %956 = vperm.xlu0 %955, %v399
      %v957 = vpop.permute.xlu0 %956
      %959 = vset.pattern.permute.xlu0 1
      %960 = vperm.xlu0 %959, %v400
      %v961 = vpop.permute.xlu0 %960
      %963 = vset.pattern.permute.xlu0 1
      %964 = vperm.xlu0 %963, %v401
      %v965 = vpop.permute.xlu0 %964
      %967 = vset.pattern.permute.xlu0 1
      %968 = vperm.xlu0 %967, %v402
      %v969 = vpop.permute.xlu0 %968
      %971 = vset.pattern.permute.xlu0 1
      %972 = vperm.xlu0 %971, %v403
      %v973 = vpop.permute.xlu0 %972
      %v975 = vmul.f32 %v913, %v719
      %v976 = vmul.f32 %v917, %v720
      %v977 = vmul.f32 %v921, %v721
      %v978 = vmul.f32 %v925, %v722
      %v979 = vmul.f32 %v929, %v723
      %v980 = vmul.f32 %v933, %v724
      %v981 = vmul.f32 %v937, %v725
      %v982 = vmul.f32 %v941, %v726
      %v983 = vmul.f32 %v945, %v727
      %v984 = vmul.f32 %v949, %v728
      %v985 = vmul.f32 %v953, %v729
      %v986 = vmul.f32 %v957, %v730
      %v987 = vmul.f32 %v961, %v731
      %v988 = vmul.f32 %v965, %v732
      %v989 = vmul.f32 %v969, %v733
      %v990 = vmul.f32 %v973, %v734
      %v991 = vadd.f32 %v895, %v975
      %v992 = vadd.f32 %v896, %v976
      %v993 = vadd.f32 %v897, %v977
      %v994 = vadd.f32 %v898, %v978
      %v995 = vadd.f32 %v899, %v979
      %v996 = vadd.f32 %v900, %v980
      %v997 = vadd.f32 %v901, %v981
      %v998 = vadd.f32 %v902, %v982
      %v999 = vadd.f32 %v903, %v983
      %v1000 = vadd.f32 %v904, %v984
      %v1001 = vadd.f32 %v905, %v985
      %v1002 = vadd.f32 %v906, %v986
      %v1003 = vadd.f32 %v907, %v987
      %v1004 = vadd.f32 %v908, %v988
      %v1005 = vadd.f32 %v909, %v989
      %v1006 = vadd.f32 %v910, %v990
      %1007 = vset.pattern.permute.xlu0 2
      %1008 = vperm.xlu0 %1007, %v388
      %v1009 = vpop.permute.xlu0 %1008
      %1011 = vset.pattern.permute.xlu0 2
      %1012 = vperm.xlu0 %1011, %v389
      %v1013 = vpop.permute.xlu0 %1012
      %1015 = vset.pattern.permute.xlu0 2
      %1016 = vperm.xlu0 %1015, %v390
      %v1017 = vpop.permute.xlu0 %1016
      %1019 = vset.pattern.permute.xlu0 2
      %1020 = vperm.xlu0 %1019, %v391
      %v1021 = vpop.permute.xlu0 %1020
      %1023 = vset.pattern.permute.xlu0 2
      %1024 = vperm.xlu0 %1023, %v392
      %v1025 = vpop.permute.xlu0 %1024
      %1027 = vset.pattern.permute.xlu0 2
      %1028 = vperm.xlu0 %1027, %v393
      %v1029 = vpop.permute.xlu0 %1028
      %1031 = vset.pattern.permute.xlu0 2
      %1032 = vperm.xlu0 %1031, %v394
      %v1033 = vpop.permute.xlu0 %1032
      %1035 = vset.pattern.permute.xlu0 2
      %1036 = vperm.xlu0 %1035, %v395
      %v1037 = vpop.permute.xlu0 %1036
      %1039 = vset.pattern.permute.xlu0 2
      %1040 = vperm.xlu0 %1039, %v396
      %v1041 = vpop.permute.xlu0 %1040
      %1043 = vset.pattern.permute.xlu0 2
      %1044 = vperm.xlu0 %1043, %v397
      %v1045 = vpop.permute.xlu0 %1044
      %1047 = vset.pattern.permute.xlu0 2
      %1048 = vperm.xlu0 %1047, %v398
      %v1049 = vpop.permute.xlu0 %1048
      %1051 = vset.pattern.permute.xlu0 2
      %1052 = vperm.xlu0 %1051, %v399
      %v1053 = vpop.permute.xlu0 %1052
      %1055 = vset.pattern.permute.xlu0 2
      %1056 = vperm.xlu0 %1055, %v400
      %v1057 = vpop.permute.xlu0 %1056
      %1059 = vset.pattern.permute.xlu0 2
      %1060 = vperm.xlu0 %1059, %v401
      %v1061 = vpop.permute.xlu0 %1060
      %1063 = vset.pattern.permute.xlu0 2
      %1064 = vperm.xlu0 %1063, %v402
      %v1065 = vpop.permute.xlu0 %1064
      %1067 = vset.pattern.permute.xlu0 2
      %1068 = vperm.xlu0 %1067, %v403
      %v1069 = vpop.permute.xlu0 %1068
      %v1071 = vmul.f32 %v1009, %v719
      %v1072 = vmul.f32 %v1013, %v720
      %v1073 = vmul.f32 %v1017, %v721
      %v1074 = vmul.f32 %v1021, %v722
      %v1075 = vmul.f32 %v1025, %v723
      %v1076 = vmul.f32 %v1029, %v724
      %v1077 = vmul.f32 %v1033, %v725
      %v1078 = vmul.f32 %v1037, %v726
      %v1079 = vmul.f32 %v1041, %v727
      %v1080 = vmul.f32 %v1045, %v728
      %v1081 = vmul.f32 %v1049, %v729
      %v1082 = vmul.f32 %v1053, %v730
      %v1083 = vmul.f32 %v1057, %v731
      %v1084 = vmul.f32 %v1061, %v732
      %v1085 = vmul.f32 %v1065, %v733
      %v1086 = vmul.f32 %v1069, %v734
      %1103 = vrot.lane.b32.xlu0 %v1071, 96
      %v1104 = vpop.permute.xlu0 %1103
      %1105 = vrot.lane.b32.xlu0 %v1072, 96
      %v1106 = vpop.permute.xlu0 %1105
      %1107 = vrot.lane.b32.xlu0 %v1073, 96
      %v1108 = vpop.permute.xlu0 %1107
      %1109 = vrot.lane.b32.xlu0 %v1074, 96
      %v1110 = vpop.permute.xlu0 %1109
      %1111 = vrot.lane.b32.xlu0 %v1075, 96
      %v1112 = vpop.permute.xlu0 %1111
      %1113 = vrot.lane.b32.xlu0 %v1076, 96
      %v1114 = vpop.permute.xlu0 %1113
      %1115 = vrot.lane.b32.xlu0 %v1077, 96
      %v1116 = vpop.permute.xlu0 %1115
      %1117 = vrot.lane.b32.xlu0 %v1078, 96
      %v1118 = vpop.permute.xlu0 %1117
      %1119 = vrot.lane.b32.xlu0 %v1079, 96
      %v1120 = vpop.permute.xlu0 %1119
      %1121 = vrot.lane.b32.xlu0 %v1080, 96
      %v1122 = vpop.permute.xlu0 %1121
      %1123 = vrot.lane.b32.xlu0 %v1081, 96
      %v1124 = vpop.permute.xlu0 %1123
      %1125 = vrot.lane.b32.xlu0 %v1082, 96
      %v1126 = vpop.permute.xlu0 %1125
      %1127 = vrot.lane.b32.xlu0 %v1083, 96
      %v1128 = vpop.permute.xlu0 %1127
      %1129 = vrot.lane.b32.xlu0 %v1084, 96
      %v1130 = vpop.permute.xlu0 %1129
      %1131 = vrot.lane.b32.xlu0 %v1085, 96
      %v1132 = vpop.permute.xlu0 %1131
      %1133 = vrot.lane.b32.xlu0 %v1086, 96
      %v1134 = vpop.permute.xlu0 %1133
      %v1151 = vadd.f32 %v991, %v1104
      %v1152 = vadd.f32 %v992, %v1106
      %v1153 = vadd.f32 %v993, %v1108
      %v1154 = vadd.f32 %v994, %v1110
      %v1155 = vadd.f32 %v995, %v1112
      %v1156 = vadd.f32 %v996, %v1114
      %v1157 = vadd.f32 %v997, %v1116
      %v1158 = vadd.f32 %v998, %v1118
      %v1159 = vadd.f32 %v999, %v1120
      %v1160 = vadd.f32 %v1000, %v1122
      %v1161 = vadd.f32 %v1001, %v1124
      %v1162 = vadd.f32 %v1002, %v1126
      %v1163 = vadd.f32 %v1003, %v1128
      %v1164 = vadd.f32 %v1004, %v1130
      %v1165 = vadd.f32 %v1005, %v1132
      %v1166 = vadd.f32 %v1006, %v1134
      %1167 = vset.pattern.permute.xlu0 3
      %1168 = vperm.xlu0 %1167, %v388
      %v1169 = vpop.permute.xlu0 %1168
      %1171 = vset.pattern.permute.xlu0 3
      %1172 = vperm.xlu0 %1171, %v389
      %v1173 = vpop.permute.xlu0 %1172
      %1175 = vset.pattern.permute.xlu0 3
      %1176 = vperm.xlu0 %1175, %v390
      %v1177 = vpop.permute.xlu0 %1176
      %1179 = vset.pattern.permute.xlu0 3
      %1180 = vperm.xlu0 %1179, %v391
      %v1181 = vpop.permute.xlu0 %1180
      %1183 = vset.pattern.permute.xlu0 3
      %1184 = vperm.xlu0 %1183, %v392
      %v1185 = vpop.permute.xlu0 %1184
      %1187 = vset.pattern.permute.xlu0 3
      %1188 = vperm.xlu0 %1187, %v393
      %v1189 = vpop.permute.xlu0 %1188
      %1191 = vset.pattern.permute.xlu0 3
      %1192 = vperm.xlu0 %1191, %v394
      %v1193 = vpop.permute.xlu0 %1192
      %1195 = vset.pattern.permute.xlu0 3
      %1196 = vperm.xlu0 %1195, %v395
      %v1197 = vpop.permute.xlu0 %1196
      %1199 = vset.pattern.permute.xlu0 3
      %1200 = vperm.xlu0 %1199, %v396
      %v1201 = vpop.permute.xlu0 %1200
      %1203 = vset.pattern.permute.xlu0 3
      %1204 = vperm.xlu0 %1203, %v397
      %v1205 = vpop.permute.xlu0 %1204
      %1207 = vset.pattern.permute.xlu0 3
      %1208 = vperm.xlu0 %1207, %v398
      %v1209 = vpop.permute.xlu0 %1208
      %1211 = vset.pattern.permute.xlu0 3
      %1212 = vperm.xlu0 %1211, %v399
      %v1213 = vpop.permute.xlu0 %1212
      %1215 = vset.pattern.permute.xlu0 3
      %1216 = vperm.xlu0 %1215, %v400
      %v1217 = vpop.permute.xlu0 %1216
      %1219 = vset.pattern.permute.xlu0 3
      %1220 = vperm.xlu0 %1219, %v401
      %v1221 = vpop.permute.xlu0 %1220
      %1223 = vset.pattern.permute.xlu0 3
      %1224 = vperm.xlu0 %1223, %v402
      %v1225 = vpop.permute.xlu0 %1224
      %1227 = vset.pattern.permute.xlu0 3
      %1228 = vperm.xlu0 %1227, %v403
      %v1229 = vpop.permute.xlu0 %1228
      %v1231 = vmul.f32 %v1169, %v719
      %v1232 = vmul.f32 %v1173, %v720
      %v1233 = vmul.f32 %v1177, %v721
      %v1234 = vmul.f32 %v1181, %v722
      %v1235 = vmul.f32 %v1185, %v723
      %v1236 = vmul.f32 %v1189, %v724
      %v1237 = vmul.f32 %v1193, %v725
      %v1238 = vmul.f32 %v1197, %v726
      %v1239 = vmul.f32 %v1201, %v727
      %v1240 = vmul.f32 %v1205, %v728
      %v1241 = vmul.f32 %v1209, %v729
      %v1242 = vmul.f32 %v1213, %v730
      %v1243 = vmul.f32 %v1217, %v731
      %v1244 = vmul.f32 %v1221, %v732
      %v1245 = vmul.f32 %v1225, %v733
      %v1246 = vmul.f32 %v1229, %v734
      %1263 = vrot.lane.b32.xlu0 %v1231, 64
      %v1264 = vpop.permute.xlu0 %1263
      %1265 = vrot.lane.b32.xlu0 %v1232, 64
      %v1266 = vpop.permute.xlu0 %1265
      %1267 = vrot.lane.b32.xlu0 %v1233, 64
      %v1268 = vpop.permute.xlu0 %1267
      %1269 = vrot.lane.b32.xlu0 %v1234, 64
      %v1270 = vpop.permute.xlu0 %1269
      %1271 = vrot.lane.b32.xlu0 %v1235, 64
      %v1272 = vpop.permute.xlu0 %1271
      %1273 = vrot.lane.b32.xlu0 %v1236, 64
      %v1274 = vpop.permute.xlu0 %1273
      %1275 = vrot.lane.b32.xlu0 %v1237, 64
      %v1276 = vpop.permute.xlu0 %1275
      %1277 = vrot.lane.b32.xlu0 %v1238, 64
      %v1278 = vpop.permute.xlu0 %1277
      %1279 = vrot.lane.b32.xlu0 %v1239, 64
      %v1280 = vpop.permute.xlu0 %1279
      %1281 = vrot.lane.b32.xlu0 %v1240, 64
      %v1282 = vpop.permute.xlu0 %1281
      %1283 = vrot.lane.b32.xlu0 %v1241, 64
      %v1284 = vpop.permute.xlu0 %1283
      %1285 = vrot.lane.b32.xlu0 %v1242, 64
      %v1286 = vpop.permute.xlu0 %1285
      %1287 = vrot.lane.b32.xlu0 %v1243, 64
      %v1288 = vpop.permute.xlu0 %1287
      %1289 = vrot.lane.b32.xlu0 %v1244, 64
      %v1290 = vpop.permute.xlu0 %1289
      %1291 = vrot.lane.b32.xlu0 %v1245, 64
      %v1292 = vpop.permute.xlu0 %1291
      %1293 = vrot.lane.b32.xlu0 %v1246, 64
      %v1294 = vpop.permute.xlu0 %1293
      %v1311 = vadd.f32 %v1151, %v1264
      %v1312 = vadd.f32 %v1152, %v1266
      %v1313 = vadd.f32 %v1153, %v1268
      %v1314 = vadd.f32 %v1154, %v1270
      %v1315 = vadd.f32 %v1155, %v1272
      %v1316 = vadd.f32 %v1156, %v1274
      %v1317 = vadd.f32 %v1157, %v1276
      %v1318 = vadd.f32 %v1158, %v1278
      %v1319 = vadd.f32 %v1159, %v1280
      %v1320 = vadd.f32 %v1160, %v1282
      %v1321 = vadd.f32 %v1161, %v1284
      %v1322 = vadd.f32 %v1162, %v1286
      %v1323 = vadd.f32 %v1163, %v1288
      %v1324 = vadd.f32 %v1164, %v1290
      %v1325 = vadd.f32 %v1165, %v1292
      %v1326 = vadd.f32 %v1166, %v1294
      %vm1327 = vcmp.gt.f32.partialorder %v1311, 0.0
      %vm1328 = vcmp.gt.f32.partialorder %v1312, 0.0
      %vm1329 = vcmp.gt.f32.partialorder %v1313, 0.0
      %vm1330 = vcmp.gt.f32.partialorder %v1314, 0.0
      %vm1331 = vcmp.gt.f32.partialorder %v1315, 0.0
      %vm1332 = vcmp.gt.f32.partialorder %v1316, 0.0
      %vm1333 = vcmp.gt.f32.partialorder %v1317, 0.0
      %vm1334 = vcmp.gt.f32.partialorder %v1318, 0.0
      %vm1335 = vcmp.gt.f32.partialorder %v1319, 0.0
      %vm1336 = vcmp.gt.f32.partialorder %v1320, 0.0
      %vm1337 = vcmp.gt.f32.partialorder %v1321, 0.0
      %vm1338 = vcmp.gt.f32.partialorder %v1322, 0.0
      %vm1339 = vcmp.gt.f32.partialorder %v1323, 0.0
      %vm1340 = vcmp.gt.f32.partialorder %v1324, 0.0
      %vm1341 = vcmp.gt.f32.partialorder %v1325, 0.0
      %vm1342 = vcmp.gt.f32.partialorder %v1326, 0.0
      %v1343 = vmin.f32 %v1311, 0.0
      %v1344 = vmin.f32 %v1312, 0.0
      %v1345 = vmin.f32 %v1313, 0.0
      %v1346 = vmin.f32 %v1314, 0.0
      %v1347 = vmin.f32 %v1315, 0.0
      %v1348 = vmin.f32 %v1316, 0.0
      %v1349 = vmin.f32 %v1317, 0.0
      %v1350 = vmin.f32 %v1318, 0.0
      %v1351 = vmin.f32 %v1319, 0.0
      %v1352 = vmin.f32 %v1320, 0.0
      %v1353 = vmin.f32 %v1321, 0.0
      %v1354 = vmin.f32 %v1322, 0.0
      %v1355 = vmin.f32 %v1323, 0.0
      %v1356 = vmin.f32 %v1324, 0.0
      %v1357 = vmin.f32 %v1325, 0.0
      %v1358 = vmin.f32 %v1326, 0.0
      %v1359 = vmul.f32 %v1343, 1.442695
      %v1360 = vpow.pop %v1359
      %v1361 = vmul.f32 %v1344, 1.442695
      %v1362 = vpow.pop %v1361
      %v1363 = vmul.f32 %v1345, 1.442695
      %v1364 = vpow.pop %v1363
      %v1365 = vmul.f32 %v1346, 1.442695
      %v1366 = vpow.pop %v1365
      %v1367 = vmul.f32 %v1347, 1.442695
      %v1368 = vpow.pop %v1367
      %v1369 = vmul.f32 %v1348, 1.442695
      %v1370 = vpow.pop %v1369
      %v1371 = vmul.f32 %v1349, 1.442695
      %v1372 = vpow.pop %v1371
      %v1373 = vmul.f32 %v1350, 1.442695
      %v1374 = vpow.pop %v1373
      %v1375 = vmul.f32 %v1351, 1.442695
      %v1376 = vpow.pop %v1375
      %v1377 = vmul.f32 %v1352, 1.442695
      %v1378 = vpow.pop %v1377
      %v1379 = vmul.f32 %v1353, 1.442695
      %v1380 = vpow.pop %v1379
      %v1381 = vmul.f32 %v1354, 1.442695
      %v1382 = vpow.pop %v1381
      %v1383 = vmul.f32 %v1355, 1.442695
      %v1384 = vpow.pop %v1383
      %v1385 = vmul.f32 %v1356, 1.442695
      %v1386 = vpow.pop %v1385
      %v1387 = vmul.f32 %v1357, 1.442695
      %v1388 = vpow.pop %v1387
      %v1389 = vmul.f32 %v1358, 1.442695
      %v1390 = vpow.pop %v1389
      %v1391 = vsub.f32 %v1360, 1.0
      %v1392 = vsub.f32 %v1362, 1.0
      %v1393 = vsub.f32 %v1364, 1.0
      %v1394 = vsub.f32 %v1366, 1.0
      %v1395 = vsub.f32 %v1368, 1.0
      %v1396 = vsub.f32 %v1370, 1.0
      %v1397 = vsub.f32 %v1372, 1.0
      %v1398 = vsub.f32 %v1374, 1.0
      %v1399 = vsub.f32 %v1376, 1.0
      %v1400 = vsub.f32 %v1378, 1.0
      %v1401 = vsub.f32 %v1380, 1.0
      %v1402 = vsub.f32 %v1382, 1.0
      %v1403 = vsub.f32 %v1384, 1.0
      %v1404 = vsub.f32 %v1386, 1.0
      %v1405 = vsub.f32 %v1388, 1.0
      %v1406 = vsub.f32 %v1390, 1.0
      %v1407 = vsel %vm1327, %v1311, %v1391
      %v1408 = vsel %vm1328, %v1312, %v1392
      %v1409 = vsel %vm1329, %v1313, %v1393
      %v1410 = vsel %vm1330, %v1314, %v1394
      %v1411 = vsel %vm1331, %v1315, %v1395
      %v1412 = vsel %vm1332, %v1316, %v1396
      %v1413 = vsel %vm1333, %v1317, %v1397
      %v1414 = vsel %vm1334, %v1318, %v1398
      %v1415 = vsel %vm1335, %v1319, %v1399
      %v1416 = vsel %vm1336, %v1320, %v1400
      %v1417 = vsel %vm1337, %v1321, %v1401
      %v1418 = vsel %vm1338, %v1322, %v1402
      %v1419 = vsel %vm1339, %v1323, %v1403
      %v1420 = vsel %vm1340, %v1324, %v1404
      %v1421 = vsel %vm1341, %v1325, %v1405
      %v1422 = vsel %vm1342, %v1326, %v1406
      %v1423 = vld [vmem:[%s6] sm:$0xf]
      %v1424 = vld [vmem:[%s6 + $0x4] sm:$0xf]
      %v1425 = vld [vmem:[%s6 + $0x8] sm:$0xf]
      %v1426 = vld [vmem:[%s6 + $0xc] sm:$0xf]
      %v1427 = vld [vmem:[%s6 + $0x10] sm:$0xf]
      %v1428 = vld [vmem:[%s6 + $0x14] sm:$0xf]
      %v1429 = vld [vmem:[%s6 + $0x18] sm:$0xf]
      %v1430 = vld [vmem:[%s6 + $0x1c] sm:$0xf]
      %v1431 = vld [vmem:[%s7] sm:$0x1]
      %v1433 = vperm.slane %v1431, 0
      %1443 = vrot.lane.b32.xlu0 %v601, 64
      %v1444 = vpop.permute.xlu0 %1443
      %1445 = vrot.lane.b32.xlu0 %v602, 64
      %v1446 = vpop.permute.xlu0 %1445
      %1447 = vrot.lane.b32.xlu0 %v603, 64
      %v1448 = vpop.permute.xlu0 %1447
      %1449 = vrot.lane.b32.xlu0 %v604, 64
      %v1450 = vpop.permute.xlu0 %1449
      %1451 = vrot.lane.b32.xlu0 %v605, 64
      %v1452 = vpop.permute.xlu0 %1451
      %1453 = vrot.lane.b32.xlu0 %v606, 64
      %v1454 = vpop.permute.xlu0 %1453
      %1455 = vrot.lane.b32.xlu0 %v607, 64
      %v1456 = vpop.permute.xlu0 %1455
      %1457 = vrot.lane.b32.xlu0 %v608, 64
      %v1458 = vpop.permute.xlu0 %1457
      %v1467 = vunpack.c.l.b16 %v1423
      %v1468 = vunpack.c.l.b16 %v1424
      %v1469 = vunpack.c.l.b16 %v1425
      %v1470 = vunpack.c.l.b16 %v1426
      %v1471 = vunpack.c.l.b16 %v1427
      %v1472 = vunpack.c.l.b16 %v1428
      %v1473 = vunpack.c.l.b16 %v1429
      %v1474 = vunpack.c.l.b16 %v1430
      %v1475 = vpack.c.b16 %v1468, %v1467
      %v1476 = vpack.c.b16 %v1470, %v1469
      %v1477 = vpack.c.b16 %v1472, %v1471
      %v1478 = vpack.c.b16 %v1474, %v1473
      %v1484 = vsel %vm645, %v1444, 0
      %v1487 = vsel %vm645, %v1446, 0
      %v1490 = vsel %vm645, %v1448, 0
      %v1493 = vsel %vm645, %v1450, 0
      %v1496 = vsel %vm645, %v1452, 0
      %v1499 = vsel %vm645, %v1454, 0
      %v1502 = vsel %vm645, %v1456, 0
      %v1505 = vsel %vm645, %v1458, 0
      %1507 = vmatpush.bf16.msra.mxu0 0
      %1508 = vmatpush.bf16.msra.mxu0 0
      %1509 = vmatpush.bf16.msra.mxu0 0
      %1510 = vmatpush.bf16.msra.mxu0 0
      %1511 = vmatpush.bf16.msra.mxu0 %v1478
      %1512 = vmatpush.bf16.msra.mxu0 %v1477
      %1513 = vmatpush.bf16.msra.mxu0 %v1476
      %1514 = vmatpush.bf16.msra.mxu0 %v1475
      %1515 = vmatmul.bf16.gmra.mxu0 %v1484
      %v1516 = vpop.f32.mrf.mxu0
      %v1517 = vadd.f32 %v1433, %v1516
      %v1518 = vpop.f32.mrf.mxu0
      %v1519 = vadd.f32 %v1433, %v1518
      %1520 = vmatmul.bf16.gmra.mxu0 %v1487
      %v1521 = vpop.f32.mrf.mxu0
      %v1522 = vadd.f32 %v1433, %v1521
      %v1523 = vpop.f32.mrf.mxu0
      %v1524 = vadd.f32 %v1433, %v1523
      %1525 = vmatmul.bf16.gmra.mxu0 %v1490
      %v1526 = vpop.f32.mrf.mxu0
      %v1527 = vadd.f32 %v1433, %v1526
      %v1528 = vpop.f32.mrf.mxu0
      %v1529 = vadd.f32 %v1433, %v1528
      %1530 = vmatmul.bf16.gmra.mxu0 %v1493
      %v1531 = vpop.f32.mrf.mxu0
      %v1532 = vadd.f32 %v1433, %v1531
      %v1533 = vpop.f32.mrf.mxu0
      %v1534 = vadd.f32 %v1433, %v1533
      %1535 = vmatmul.bf16.gmra.mxu0 %v1496
      %v1536 = vpop.f32.mrf.mxu0
      %v1537 = vadd.f32 %v1433, %v1536
      %v1538 = vpop.f32.mrf.mxu0
      %v1539 = vadd.f32 %v1433, %v1538
      %1540 = vmatmul.bf16.gmra.mxu0 %v1499
      %v1541 = vpop.f32.mrf.mxu0
      %v1542 = vadd.f32 %v1433, %v1541
      %v1543 = vpop.f32.mrf.mxu0
      %v1544 = vadd.f32 %v1433, %v1543
      %1545 = vmatmul.bf16.gmra.mxu0 %v1502
      %v1546 = vpop.f32.mrf.mxu0
      %v1547 = vadd.f32 %v1433, %v1546
      %v1548 = vpop.f32.mrf.mxu0
      %v1549 = vadd.f32 %v1433, %v1548
      %1550 = vmatmul.bf16.gmra.mxu0 %v1505
      %v1551 = vpop.f32.mrf.mxu0
      %v1552 = vadd.f32 %v1433, %v1551
      %v1553 = vpop.f32.mrf.mxu0
      %v1554 = vadd.f32 %v1433, %v1553
      %1555 = vdwg.mxu0
      %v1556 = vand.u32 2147483647, %v1517
      %v1557 = vand.u32 2147483647, %v1519
      %v1558 = vand.u32 2147483647, %v1522
      %v1559 = vand.u32 2147483647, %v1524
      %v1560 = vand.u32 2147483647, %v1527
      %v1561 = vand.u32 2147483647, %v1529
      %v1562 = vand.u32 2147483647, %v1532
      %v1563 = vand.u32 2147483647, %v1534
      %v1564 = vand.u32 2147483647, %v1537
      %v1565 = vand.u32 2147483647, %v1539
      %v1566 = vand.u32 2147483647, %v1542
      %v1567 = vand.u32 2147483647, %v1544
      %v1568 = vand.u32 2147483647, %v1547
      %v1569 = vand.u32 2147483647, %v1549
      %v1570 = vand.u32 2147483647, %v1552
      %v1571 = vand.u32 2147483647, %v1554
      %1588 = vrot.lane.b32.xlu0 %v1556, 32
      %v1589 = vpop.permute.xlu0 %1588
      %1590 = vrot.lane.b32.xlu0 %v1557, 32
      %v1591 = vpop.permute.xlu0 %1590
      %1592 = vrot.lane.b32.xlu0 %v1558, 32
      %v1593 = vpop.permute.xlu0 %1592
      %1594 = vrot.lane.b32.xlu0 %v1559, 32
      %v1595 = vpop.permute.xlu0 %1594
      %1596 = vrot.lane.b32.xlu0 %v1560, 32
      %v1597 = vpop.permute.xlu0 %1596
      %1598 = vrot.lane.b32.xlu0 %v1561, 32
      %v1599 = vpop.permute.xlu0 %1598
      %1600 = vrot.lane.b32.xlu0 %v1562, 32
      %v1601 = vpop.permute.xlu0 %1600
      %1602 = vrot.lane.b32.xlu0 %v1563, 32
      %v1603 = vpop.permute.xlu0 %1602
      %1604 = vrot.lane.b32.xlu0 %v1564, 32
      %v1605 = vpop.permute.xlu0 %1604
      %1606 = vrot.lane.b32.xlu0 %v1565, 32
      %v1607 = vpop.permute.xlu0 %1606
      %1608 = vrot.lane.b32.xlu0 %v1566, 32
      %v1609 = vpop.permute.xlu0 %1608
      %1610 = vrot.lane.b32.xlu0 %v1567, 32
      %v1611 = vpop.permute.xlu0 %1610
      %1612 = vrot.lane.b32.xlu0 %v1568, 32
      %v1613 = vpop.permute.xlu0 %1612
      %1614 = vrot.lane.b32.xlu0 %v1569, 32
      %v1615 = vpop.permute.xlu0 %1614
      %1616 = vrot.lane.b32.xlu0 %v1570, 32
      %v1617 = vpop.permute.xlu0 %1616
      %1618 = vrot.lane.b32.xlu0 %v1571, 32
      %v1619 = vpop.permute.xlu0 %1618
      %v1636 = vmul.f32 %v1407, %v1589
      %v1637 = vmul.f32 %v1408, %v1591
      %v1638 = vmul.f32 %v1409, %v1593
      %v1639 = vmul.f32 %v1410, %v1595
      %v1640 = vmul.f32 %v1411, %v1597
      %v1641 = vmul.f32 %v1412, %v1599
      %v1642 = vmul.f32 %v1413, %v1601
      %v1643 = vmul.f32 %v1414, %v1603
      %v1644 = vmul.f32 %v1415, %v1605
      %v1645 = vmul.f32 %v1416, %v1607
      %v1646 = vmul.f32 %v1417, %v1609
      %v1647 = vmul.f32 %v1418, %v1611
      %v1648 = vmul.f32 %v1419, %v1613
      %v1649 = vmul.f32 %v1420, %v1615
      %v1650 = vmul.f32 %v1421, %v1617
      %v1651 = vmul.f32 %v1422, %v1619
      %v1652 = vld [vmem:[%s8] sm:$0x1]
      %v1654 = vperm.slane %v1652, 0
      %v1656 = vmul.f32 %v570, %v1654
      %v1657 = vmul.f32 %v572, %v1654
      %v1658 = vmul.f32 %v574, %v1654
      %v1659 = vmul.f32 %v576, %v1654
      %v1660 = vmul.f32 %v578, %v1654
      %v1661 = vmul.f32 %v580, %v1654
      %v1662 = vmul.f32 %v582, %v1654
      %v1663 = vmul.f32 %v584, %v1654
      %v1664 = vmul.f32 %v586, %v1654
      %v1665 = vmul.f32 %v588, %v1654
      %v1666 = vmul.f32 %v590, %v1654
      %v1667 = vmul.f32 %v592, %v1654
      %v1668 = vmul.f32 %v594, %v1654
      %v1669 = vmul.f32 %v596, %v1654
      %v1670 = vmul.f32 %v598, %v1654
      %v1671 = vmul.f32 %v600, %v1654
      %1688 = vrot.lane.b32.xlu0 %v1656, 32
      %v1689 = vpop.permute.xlu0 %1688
      %1690 = vrot.lane.b32.xlu0 %v1657, 32
      %v1691 = vpop.permute.xlu0 %1690
      %1692 = vrot.lane.b32.xlu0 %v1658, 32
      %v1693 = vpop.permute.xlu0 %1692
      %1694 = vrot.lane.b32.xlu0 %v1659, 32
      %v1695 = vpop.permute.xlu0 %1694
      %1696 = vrot.lane.b32.xlu0 %v1660, 32
      %v1697 = vpop.permute.xlu0 %1696
      %1698 = vrot.lane.b32.xlu0 %v1661, 32
      %v1699 = vpop.permute.xlu0 %1698
      %1700 = vrot.lane.b32.xlu0 %v1662, 32
      %v1701 = vpop.permute.xlu0 %1700
      %1702 = vrot.lane.b32.xlu0 %v1663, 32
      %v1703 = vpop.permute.xlu0 %1702
      %1704 = vrot.lane.b32.xlu0 %v1664, 32
      %v1705 = vpop.permute.xlu0 %1704
      %1706 = vrot.lane.b32.xlu0 %v1665, 32
      %v1707 = vpop.permute.xlu0 %1706
      %1708 = vrot.lane.b32.xlu0 %v1666, 32
      %v1709 = vpop.permute.xlu0 %1708
      %1710 = vrot.lane.b32.xlu0 %v1667, 32
      %v1711 = vpop.permute.xlu0 %1710
      %1712 = vrot.lane.b32.xlu0 %v1668, 32
      %v1713 = vpop.permute.xlu0 %1712
      %1714 = vrot.lane.b32.xlu0 %v1669, 32
      %v1715 = vpop.permute.xlu0 %1714
      %1716 = vrot.lane.b32.xlu0 %v1670, 32
      %v1717 = vpop.permute.xlu0 %1716
      %1718 = vrot.lane.b32.xlu0 %v1671, 32
      %v1719 = vpop.permute.xlu0 %1718
      %v1736 = vadd.f32 %v1636, %v1689
      %v1737 = vadd.f32 %v1637, %v1691
      %v1738 = vadd.f32 %v1638, %v1693
      %v1739 = vadd.f32 %v1639, %v1695
      %v1740 = vadd.f32 %v1640, %v1697
      %v1741 = vadd.f32 %v1641, %v1699
      %v1742 = vadd.f32 %v1642, %v1701
      %v1743 = vadd.f32 %v1643, %v1703
      %v1744 = vadd.f32 %v1644, %v1705
      %v1745 = vadd.f32 %v1645, %v1707
      %v1746 = vadd.f32 %v1646, %v1709
      %v1747 = vadd.f32 %v1647, %v1711
      %v1748 = vadd.f32 %v1648, %v1713
      %v1749 = vadd.f32 %v1649, %v1715
      %v1750 = vadd.f32 %v1650, %v1717
      %v1751 = vadd.f32 %v1651, %v1719
      %1768 = vrot.lane.b32.xlu0 %v1736, 96
      %v1769 = vpop.permute.xlu0 %1768
      %1770 = vrot.lane.b32.xlu0 %v1737, 96
      %v1771 = vpop.permute.xlu0 %1770
      %1772 = vrot.lane.b32.xlu0 %v1738, 96
      %v1773 = vpop.permute.xlu0 %1772
      %1774 = vrot.lane.b32.xlu0 %v1739, 96
      %v1775 = vpop.permute.xlu0 %1774
      %1776 = vrot.lane.b32.xlu0 %v1740, 96
      %v1777 = vpop.permute.xlu0 %1776
      %1778 = vrot.lane.b32.xlu0 %v1741, 96
      %v1779 = vpop.permute.xlu0 %1778
      %1780 = vrot.lane.b32.xlu0 %v1742, 96
      %v1781 = vpop.permute.xlu0 %1780
      %1782 = vrot.lane.b32.xlu0 %v1743, 96
      %v1783 = vpop.permute.xlu0 %1782
      %1784 = vrot.lane.b32.xlu0 %v1744, 96
      %v1785 = vpop.permute.xlu0 %1784
      %1786 = vrot.lane.b32.xlu0 %v1745, 96
      %v1787 = vpop.permute.xlu0 %1786
      %1788 = vrot.lane.b32.xlu0 %v1746, 96
      %v1789 = vpop.permute.xlu0 %1788
      %1790 = vrot.lane.b32.xlu0 %v1747, 96
      %v1791 = vpop.permute.xlu0 %1790
      %1792 = vrot.lane.b32.xlu0 %v1748, 96
      %v1793 = vpop.permute.xlu0 %1792
      %1794 = vrot.lane.b32.xlu0 %v1749, 96
      %v1795 = vpop.permute.xlu0 %1794
      %1796 = vrot.lane.b32.xlu0 %v1750, 96
      %v1797 = vpop.permute.xlu0 %1796
      %1798 = vrot.lane.b32.xlu0 %v1751, 96
      %v1799 = vpop.permute.xlu0 %1798
      %vm1816 = vcmask 261120
      %v1817 = vsel %vm1816, %v1769, 0.0
      %1818 = vadd.xlane.f32.xlu0 %v1817
      %v1819 = vpop.xlane.xlu0 %1818
      %v1820 = vsel %vm1816, %v1771, 0.0
      %1821 = vadd.xlane.f32.xlu0 %v1820
      %v1822 = vpop.xlane.xlu0 %1821
      %v1823 = vsel %vm1816, %v1773, 0.0
      %1824 = vadd.xlane.f32.xlu0 %v1823
      %v1825 = vpop.xlane.xlu0 %1824
      %v1826 = vsel %vm1816, %v1775, 0.0
      %1827 = vadd.xlane.f32.xlu0 %v1826
      %v1828 = vpop.xlane.xlu0 %1827
      %v1829 = vsel %vm1816, %v1777, 0.0
      %1830 = vadd.xlane.f32.xlu0 %v1829
      %v1831 = vpop.xlane.xlu0 %1830
      %v1832 = vsel %vm1816, %v1779, 0.0
      %1833 = vadd.xlane.f32.xlu0 %v1832
      %v1834 = vpop.xlane.xlu0 %1833
      %v1835 = vsel %vm1816, %v1781, 0.0
      %1836 = vadd.xlane.f32.xlu0 %v1835
      %v1837 = vpop.xlane.xlu0 %1836
      %v1838 = vsel %vm1816, %v1783, 0.0
      %1839 = vadd.xlane.f32.xlu0 %v1838
      %v1840 = vpop.xlane.xlu0 %1839
      %v1841 = vsel %vm1816, %v1785, 0.0
      %1842 = vadd.xlane.f32.xlu0 %v1841
      %v1843 = vpop.xlane.xlu0 %1842
      %v1844 = vsel %vm1816, %v1787, 0.0
      %1845 = vadd.xlane.f32.xlu0 %v1844
      %v1846 = vpop.xlane.xlu0 %1845
      %v1847 = vsel %vm1816, %v1789, 0.0
      %1848 = vadd.xlane.f32.xlu0 %v1847
      %v1849 = vpop.xlane.xlu0 %1848
      %v1850 = vsel %vm1816, %v1791, 0.0
      %1851 = vadd.xlane.f32.xlu0 %v1850
      %v1852 = vpop.xlane.xlu0 %1851
      %v1853 = vsel %vm1816, %v1793, 0.0
      %1854 = vadd.xlane.f32.xlu0 %v1853
      %v1855 = vpop.xlane.xlu0 %1854
      %v1856 = vsel %vm1816, %v1795, 0.0
      %1857 = vadd.xlane.f32.xlu0 %v1856
      %v1858 = vpop.xlane.xlu0 %1857
      %v1859 = vsel %vm1816, %v1797, 0.0
      %1860 = vadd.xlane.f32.xlu0 %v1859
      %v1861 = vpop.xlane.xlu0 %1860
      %v1862 = vsel %vm1816, %v1799, 0.0
      %1863 = vadd.xlane.f32.xlu0 %v1862
      %v1864 = vpop.xlane.xlu0 %1863
      %v1865 = vld [vmem:[#allocation2] sm:$0x1]
      %v1867 = vperm.slane %v1865, 0
      %v1869 = vadd.f32 %v1819, %v1867
      %v1870 = vadd.f32 %v1822, %v1867
      %v1871 = vadd.f32 %v1825, %v1867
      %v1872 = vadd.f32 %v1828, %v1867
      %v1873 = vadd.f32 %v1831, %v1867
      %v1874 = vadd.f32 %v1834, %v1867
      %v1875 = vadd.f32 %v1837, %v1867
      %v1876 = vadd.f32 %v1840, %v1867
      %v1877 = vadd.f32 %v1843, %v1867
      %v1878 = vadd.f32 %v1846, %v1867
      %v1879 = vadd.f32 %v1849, %v1867
      %v1880 = vadd.f32 %v1852, %v1867
      %v1881 = vadd.f32 %v1855, %v1867
      %v1882 = vadd.f32 %v1858, %v1867
      %v1883 = vadd.f32 %v1861, %v1867
      %v1884 = vadd.f32 %v1864, %v1867
      %vm1885 = vcmask 7168
      %1886 = vst.msk [vmem:[%s385] sm:$0xff] %vm1885, %v1869
      %1887 = vst.msk [vmem:[%s385 + $0x8] sm:$0xff] %vm1885, %v1870
      %1888 = vst.msk [vmem:[%s385 + $0x10] sm:$0xff] %vm1885, %v1871
      %1889 = vst.msk [vmem:[%s385 + $0x18] sm:$0xff] %vm1885, %v1872
      %1890 = vst.msk [vmem:[%s385 + $0x20] sm:$0xff] %vm1885, %v1873
      %1891 = vst.msk [vmem:[%s385 + $0x28] sm:$0xff] %vm1885, %v1874
      %1892 = vst.msk [vmem:[%s385 + $0x30] sm:$0xff] %vm1885, %v1875
      %1893 = vst.msk [vmem:[%s385 + $0x38] sm:$0xff] %vm1885, %v1876
      %1894 = vst.msk [vmem:[%s385 + $0x40] sm:$0xff] %vm1885, %v1877
      %1895 = vst.msk [vmem:[%s385 + $0x48] sm:$0xff] %vm1885, %v1878
      %1896 = vst.msk [vmem:[%s385 + $0x50] sm:$0xff] %vm1885, %v1879
      %1897 = vst.msk [vmem:[%s385 + $0x58] sm:$0xff] %vm1885, %v1880
      %1898 = vst.msk [vmem:[%s385 + $0x60] sm:$0xff] %vm1885, %v1881
      %1899 = vst.msk [vmem:[%s385 + $0x68] sm:$0xff] %vm1885, %v1882
      %1900 = vst.msk [vmem:[%s385 + $0x70] sm:$0xff] %vm1885, %v1883
      %1901 = vst.msk [vmem:[%s385 + $0x78] sm:$0xff] %vm1885, %v1884
      %s1902 = smul.u32 16, %s23
      %p1903 = scmp.lt.s32.totalorder %s1902, 31
      %s1904 = scalar_select %p1903, %s1902, 31
      %s1905 = smul.addr %s1904, 8
      %s1906 = scalar_lea.vmem %s10, %s1905
      // Predicated region
      $region61: #{tpu_custom_call.1} parent=59 // pred_check
        %p1907 = pneg %p261
      $region62: #{tpu_custom_call.1} parent=59 // pred_check_branch
        %1909 = sbr.rel (%p1907) target = $region64
      $region63: #{tpu_custom_call.1} parent=59 // pred_region
        %s1910 = smul.u32 16, %s23
      $region64: #{tpu_custom_call.1} parent=59 // pred_fallthru
        _
    $region60: #{tpu_custom_call.1} parent=5 // pred_fallthru
      _
    %p1911 = scmp.le.s32.totalorder 2, %s18
    // Predicated region
    $region65: #{tpu_custom_call.1} parent=5 // pred_check
      %p1912 = pneg %p1911
    $region66: #{tpu_custom_call.1} parent=5 // pred_check_branch
      %1914 = sbr.rel (%p1912) target = $region68
    $region67: #{tpu_custom_call.1} parent=5 // pred_region
      %s1915 = ssub.s32 %s18, 2
      // Predicated region
      $region69: #{tpu_custom_call.1} parent=67 // pred_check
        %p1916 = pneg %p267
      $region70: #{tpu_custom_call.1} parent=67 // pred_check_branch
        %1918 = sbr.rel (%p1916) target = $region72
      $region71: #{tpu_custom_call.1} parent=67 // pred_region
        %s1919 = smul.u32 16, %s24
        %p1920 = scmp.lt.s32.totalorder %s1919, 31
        %s1921 = scalar_select %p1920, %s1919, 31
        %s1922 = smul.addr %s1921, 8
        %s1923 = scalar_lea.vmem %s10, %s1922
      $region72: #{tpu_custom_call.1} parent=67 // pred_fallthru
        _
    $region68: #{tpu_custom_call.1} parent=5 // pred_fallthru
      _
  $region6: #{tpu_custom_call.1} parent=0 // loop_footer
    %s22 = sadd.s32 1, %s18
  $region7: #{tpu_custom_call.1} parent=0 // loop_footer_branch
    %17 = sbr.rel target = $region3
  $region8: #{tpu_custom_call.1} parent=0 // loop_exit
    _

</llo_original>
